<compile_context>
chip_gen: v7x
topology: tpu7x:2x2x1
jax: 0.10.0
libtpu: 0.0.40
codegen_flags: <defaults>
</compile_context>

<pallas_src>
import numpy as np
import jax
import jax.numpy as jnp
from jax.experimental import pallas as pl
from jax.experimental.pallas import tpu as pltpu

MAX_LEVELS = 3
KERNEL_SIZE = 5
SIGMA = 1.0
IMAGES_PER_STEP = 1   # raise on v5e/v6e (serial grid) to amortize per-step overhead


def _gaussian_1d(size=KERNEL_SIZE, sigma=SIGMA):
    ax = np.linspace(-(size - 1) / 2.0, (size - 1) / 2.0, size)
    k = np.exp(-0.5 * np.square(ax) / np.square(sigma))
    k /= np.sum(k)
    return k.astype(np.float32)


def _gaussian_2d(size=KERNEL_SIZE, sigma=SIGMA):
    # mirrors gaussian_kernel() in the PyTorch module (used by the JAX reference)
    ax = np.linspace(-(size - 1) / 2.0, (size - 1) / 2.0, size)
    xx, yy = np.meshgrid(ax, ax)
    k = np.exp(-0.5 * (np.square(xx) + np.square(yy)) / np.square(sigma))
    k /= np.sum(k)
    return k.astype(np.float32)


K1 = _gaussian_1d()   # separable taps used inside the kernel (outer(K1,K1) == G5)
G5 = _gaussian_2d()   # 2-D kernel used by the pure-JAX reference


# ----------------------------- kernel helpers -----------------------------

def _shift_down(v, s, axis):
    """result[..., i, ...] = v[..., i - s, ...]; the first s slots are filler
    (never selected by the parity masks)."""
    lead = jax.lax.slice_in_dim(v, 0, s, axis=axis)
    body = jax.lax.slice_in_dim(v, 0, v.shape[axis] - s, axis=axis)
    return jnp.concatenate([lead, body], axis=axis)


def _dilated_sep_gauss(x, s):
    """Depthwise 5x5 Gaussian with tap spacing s (dilation) and zero padding,
    evaluated on the full-resolution carrier array.  Values at row/col indices
    that are multiples of s equal the true level-log2(s) Gaussian; all other
    positions hold harmless finite values that are masked out downstream."""
    n, c, h, w = x.shape
    p = (KERNEL_SIZE // 2) * s                       # 2*s
    zw = jnp.zeros((n, c, h, p), jnp.float32)
    xp = jnp.concatenate([zw, x, zw], axis=3)        # (n, c, h, w + 4s)
    acc = float(K1[0]) * xp[:, :, :, 0:w]
    for d in range(1, KERNEL_SIZE):
        acc = acc + float(K1[d]) * xp[:, :, :, d * s:d * s + w]
    zh = jnp.zeros((n, c, p, w), jnp.float32)
    hp = jnp.concatenate([zh, acc, zh], axis=2)      # (n, c, h + 4s, w)
    out = float(K1[0]) * hp[:, :, 0:h, :]
    for d in range(1, KERNEL_SIZE):
        out = out + float(K1[d]) * hp[:, :, d * s:d * s + h, :]
    return out


def _up_from_gauss(g, row_even, col_even, s):
    """Nearest upsample(downsample(gauss)) at the valid (stride-s) positions:
    out[..., p, q] = g[..., p - s*(1-row_even), q - s*(1-col_even)]."""
    col = jnp.where(col_even, g, _shift_down(g, s, axis=3))
    return jnp.where(row_even, col, _shift_down(col, s, axis=2))


# ------------------------------- fused kernel ------------------------------

def _fused_pyramid_kernel(x_ref, t_ref, out_ref):
    # Blocks: x/t = (bt, C, H, W); out = (1, 8, 128) lane-dense scalar tile.
    x = x_ref[...]
    t = t_ref[...]
    n, c, h, w = x.shape

    # Hoisted once, shared by all levels / both tensors / final L1.
    rows4 = jax.lax.broadcasted_iota(jnp.int32, x.shape, 2)
    cols4 = jax.lax.broadcasted_iota(jnp.int32, x.shape, 3)
    rows3 = jax.lax.broadcasted_iota(jnp.int32, (n, h, w), 1)
    cols3 = jax.lax.broadcasted_iota(jnp.int32, (n, h, w), 2)

    total = jnp.float32(0.0)
    cur_x, cur_t = x, t
    for k in range(MAX_LEVELS):
        s = 1 << k
        gx = _dilated_sep_gauss(cur_x, s)
        gt = _dilated_sep_gauss(cur_t, s)
        row_even = (rows4 & s) == 0          # parity of bit k of the row index
        col_even = (cols4 & s) == 0
        lap_x = jnp.mean(jnp.abs(cur_x - _up_from_gauss(gx, row_even, col_even, s)),
                         axis=1)
        lap_t = jnp.mean(jnp.abs(cur_t - _up_from_gauss(gt, row_even, col_even, s)),
                         axis=1)
        diff = jnp.abs(lap_x - lap_t)
        if k == 0:
            part = jnp.sum(diff)
        else:
            valid = ((rows3 & (s - 1)) == 0) & ((cols3 & (s - 1)) == 0)
            part = jnp.sum(jnp.where(valid, diff, 0.0))
        total = total + part / float((h >> k) * (w >> k))
        # Next level's carrier IS the (dilated) Gaussian: the ::2 downsample is
        # implicit (valid samples thin out to stride 2^(k+1)).
        cur_x, cur_t = gx, gt

    # Final pyramid entry: L1 between the two last downsampled Gaussians,
    # computed as a parity-masked sum — never materialized, never leaves VMEM.
    S = 1 << MAX_LEVELS
    valid4 = ((rows4 & (S - 1)) == 0) & ((cols4 & (S - 1)) == 0)
    fin = jnp.sum(jnp.where(valid4, jnp.abs(cur_x - cur_t), 0.0))
    total = total + fin / float(c * (h >> MAX_LEVELS) * (w >> MAX_LEVELS))

    out_ref[...] = jnp.full(out_ref.shape, total, jnp.float32)


# ------------------------------- wrappers ----------------------------------

_PART_TILE = (8, 128)   # lane-dense carrier for the per-step partial scalar


def _vmem_limit_bytes(bt, c, h, w):
    block = bt * c * h * w * 4
    # Real footprint: 2 inputs x 2 pipeline buffers + ~20 live block-sized f32
    # temporaries inside the fused level loop (padded taps, gauss, up, lap,
    # iotas) + output tiles + 2 MiB headroom.
    need = (4 + 20) * block + 4 * _PART_TILE[0] * _PART_TILE[1] * 4 + (2 << 20)
    try:
        phys = int(pltpu.get_tpu_info().vmem_capacity_bytes)
    except Exception:                       # generation query unavailable
        phys = 64 << 20                     # v7x-safe fallback
    cap = (phys * 3) // 4                   # ~48 MiB on v7x, ~96 MiB on v5e/v6e
    return max(min(need, cap), 8 << 20)


def _fused_call(x, t, bt):
    B, C, H, W = x.shape
    steps = B // bt
    blk = (bt, C, H, W)
    img_map = lambda i: (i, 0, 0, 0)
    part_spec = pl.BlockSpec((1,) + _PART_TILE, lambda i: (i, 0, 0))
    part_shape = jax.ShapeDtypeStruct((steps,) + _PART_TILE, jnp.float32)
    # ~22 VPU flops / element / tensor / level (10 taps mul+add, up-select,
    # laplacian, diffs); everything else is noise.
    flops = 2 * MAX_LEVELS * 22 * B * C * H * W
    bytes_accessed = 2 * B * C * H * W * 4 + steps * _PART_TILE[0] * _PART_TILE[1] * 4
    return pl.pallas_call(
        _fused_pyramid_kernel,
        grid=(steps,),
        out_shape=part_shape,
        in_specs=[pl.BlockSpec(blk, img_map), pl.BlockSpec(blk, img_map)],
        out_specs=part_spec,
        compiler_params=pltpu.CompilerParams(
            dimension_semantics=("parallel",),          # v7x: both TensorCores
            vmem_limit_bytes=_vmem_limit_bytes(bt, C, H, W)),
        cost_estimate=pl.CostEstimate(
            flops=flops, transcendentals=0, bytes_accessed=bytes_accessed),
    )(x, t)


@jax.jit
def laplacian_pyramid_loss(x, target):
    B, C, H, W = x.shape
    assert H % (2 ** MAX_LEVELS) == 0 and W % (2 ** MAX_LEVELS) == 0, (
        "spatial dims must be divisible by 2**max_levels (nearest up/down parity)")
    bt = IMAGES_PER_STEP if (B % IMAGES_PER_STEP == 0) else 1
    part = _fused_call(x, target, bt)
    # Per-step scalars already carry the per-level spatial/channel normalizers;
    # only the batch mean is left to do here.
    return jnp.sum(part[:, 0, 0]) / B


# ------------------------------ pure-JAX ref --------------------------------

def _ref_conv(x):
    C = x.shape[1]
    w = jnp.broadcast_to(jnp.asarray(G5), (C, 1, KERNEL_SIZE, KERNEL_SIZE))
    return jax.lax.conv_general_dilated(
        x, w, window_strides=(1, 1), padding=((2, 2), (2, 2)),
        dimension_numbers=("NCHW", "OIHW", "NCHW"), feature_group_count=C,
        precision=jax.lax.Precision.HIGHEST)


def _ref_loss(x, t):
    total = jnp.float32(0.0)
    cx, ct = x, t
    for _ in range(MAX_LEVELS):
        gx, gt = _ref_conv(cx), _ref_conv(ct)
        dx, dt = gx[:, :, ::2, ::2], gt[:, :, ::2, ::2]
        ux = jnp.repeat(jnp.repeat(dx, 2, axis=2), 2, axis=3)
        ut = jnp.repeat(jnp.repeat(dt, 2, axis=2), 2, axis=3)
        lx = jnp.mean(jnp.abs(cx - ux), axis=1, keepdims=True)
        lt = jnp.mean(jnp.abs(ct - ut), axis=1, keepdims=True)
        total = total + jnp.mean(jnp.abs(lx - lt))
        cx, ct = dx, dt
    return total + jnp.mean(jnp.abs(cx - ct))


if __name__ == "__main__":
    key = jax.random.PRNGKey(0)
    k1, k2 = jax.random.split(key)
    B, C, H, W = 2, 3, 16, 16           # module default channels=3
    x = jax.random.normal(k1, (B, C, H, W), dtype=jnp.float32)
    target = jax.random.normal(k2, (B, C, H, W), dtype=jnp.float32)

    out = laplacian_pyramid_loss(x, target)
    out = jax.block_until_ready(out)

    ref = _ref_loss(x, target)
    assert jnp.allclose(out, ref, rtol=1e-4, atol=1e-5), (float(out), float(ref))
    print("KERNEL_OK")
</pallas_src>

<mosaic_0001>
module attributes {stable_mosaic.version = 11 : i64} {
  func.func @_fused_pyramid_kernel(%arg0: i32, %arg1: memref<1x3x16x16xf32, #tpu.memory_space<vmem>>, %arg2: memref<1x3x16x16xf32, #tpu.memory_space<vmem>>, %arg3: memref<1x8x128xf32, #tpu.memory_space<vmem>>) attributes {dimension_semantics = [#tpu.dimension_semantics<parallel>], iteration_bounds = array<i64: 2>, scalar_prefetch = 0 : i64, scratch_operands = 0 : i64, tpu.core_type = #tpu.core_type<tc>, window_params = [{transform_indices = @transform_0, window_bounds = array<i64: 1, 3, 16, 16>}, {transform_indices = @transform_1, window_bounds = array<i64: 1, 3, 16, 16>}, {transform_indices = @transform_2, window_bounds = array<i64: 1, 8, 128>}]} {
    %c0 = arith.constant 0 : index
    %c0_0 = arith.constant 0 : index
    %c0_1 = arith.constant 0 : index
    %c0_2 = arith.constant 0 : index
    %0 = vector.load %arg1[%c0, %c0_0, %c0_1, %c0_2] : memref<1x3x16x16xf32, #tpu.memory_space<vmem>>, vector<1x3x16x16xf32>
    %c0_3 = arith.constant 0 : index
    %c0_4 = arith.constant 0 : index
    %c0_5 = arith.constant 0 : index
    %c0_6 = arith.constant 0 : index
    %1 = vector.load %arg2[%c0_3, %c0_4, %c0_5, %c0_6] : memref<1x3x16x16xf32, #tpu.memory_space<vmem>>, vector<1x3x16x16xf32>
    %2 = tpu.iota {dimensions = array<i32: 2>} : vector<1x3x16x16xi32>
    %3 = tpu.iota {dimensions = array<i32: 3>} : vector<1x3x16x16xi32>
    %4 = tpu.iota {dimensions = array<i32: 1>} : vector<1x16x16xi32>
    %5 = tpu.iota {dimensions = array<i32: 2>} : vector<1x16x16xi32>
    %cst = arith.constant 0.000000e+00 : f32
    %6 = vector.broadcast %cst : f32 to vector<1x3x16x2xf32>
    %7 = tpu.concatenate %6, %0, %6 in 3 : vector<1x3x16x2xf32>, vector<1x3x16x16xf32>, vector<1x3x16x2xf32> -> vector<1x3x16x20xf32>
    %8 = vector.extract_strided_slice %7 {offsets = [0, 0, 0, 0], sizes = [1, 3, 16, 16], strides = [1, 1, 1, 1]} : vector<1x3x16x20xf32> to vector<1x3x16x16xf32>
    %cst_7 = arith.constant 0.054488685 : f32
    %9 = vector.broadcast %cst_7 : f32 to vector<1x3x16x16xf32>
    %10 = arith.mulf %9, %8 : vector<1x3x16x16xf32>
    %11 = vector.extract_strided_slice %7 {offsets = [0, 0, 0, 1], sizes = [1, 3, 16, 16], strides = [1, 1, 1, 1]} : vector<1x3x16x20xf32> to vector<1x3x16x16xf32>
    %cst_8 = arith.constant 0.244201347 : f32
    %12 = vector.broadcast %cst_8 : f32 to vector<1x3x16x16xf32>
    %13 = arith.mulf %12, %11 : vector<1x3x16x16xf32>
    %14 = arith.addf %10, %13 : vector<1x3x16x16xf32>
    %15 = vector.extract_strided_slice %7 {offsets = [0, 0, 0, 2], sizes = [1, 3, 16, 16], strides = [1, 1, 1, 1]} : vector<1x3x16x20xf32> to vector<1x3x16x16xf32>
    %cst_9 = arith.constant 0.402619958 : f32
    %16 = vector.broadcast %cst_9 : f32 to vector<1x3x16x16xf32>
    %17 = arith.mulf %16, %15 : vector<1x3x16x16xf32>
    %18 = arith.addf %14, %17 : vector<1x3x16x16xf32>
    %19 = vector.extract_strided_slice %7 {offsets = [0, 0, 0, 3], sizes = [1, 3, 16, 16], strides = [1, 1, 1, 1]} : vector<1x3x16x20xf32> to vector<1x3x16x16xf32>
    %cst_10 = arith.constant 0.244201347 : f32
    %20 = vector.broadcast %cst_10 : f32 to vector<1x3x16x16xf32>
    %21 = arith.mulf %20, %19 : vector<1x3x16x16xf32>
    %22 = arith.addf %18, %21 : vector<1x3x16x16xf32>
    %23 = vector.extract_strided_slice %7 {offsets = [0, 0, 0, 4], sizes = [1, 3, 16, 16], strides = [1, 1, 1, 1]} : vector<1x3x16x20xf32> to vector<1x3x16x16xf32>
    %cst_11 = arith.constant 0.054488685 : f32
    %24 = vector.broadcast %cst_11 : f32 to vector<1x3x16x16xf32>
    %25 = arith.mulf %24, %23 : vector<1x3x16x16xf32>
    %26 = arith.addf %22, %25 : vector<1x3x16x16xf32>
    %cst_12 = arith.constant 0.000000e+00 : f32
    %27 = vector.broadcast %cst_12 : f32 to vector<1x3x2x16xf32>
    %28 = tpu.concatenate %27, %26, %27 in 2 : vector<1x3x2x16xf32>, vector<1x3x16x16xf32>, vector<1x3x2x16xf32> -> vector<1x3x20x16xf32>
    %29 = vector.extract_strided_slice %28 {offsets = [0, 0, 0, 0], sizes = [1, 3, 16, 16], strides = [1, 1, 1, 1]} : vector<1x3x20x16xf32> to vector<1x3x16x16xf32>
    %cst_13 = arith.constant 0.054488685 : f32
    %30 = vector.broadcast %cst_13 : f32 to vector<1x3x16x16xf32>
    %31 = arith.mulf %30, %29 : vector<1x3x16x16xf32>
    %32 = vector.extract_strided_slice %28 {offsets = [0, 0, 1, 0], sizes = [1, 3, 16, 16], strides = [1, 1, 1, 1]} : vector<1x3x20x16xf32> to vector<1x3x16x16xf32>
    %cst_14 = arith.constant 0.244201347 : f32
    %33 = vector.broadcast %cst_14 : f32 to vector<1x3x16x16xf32>
    %34 = arith.mulf %33, %32 : vector<1x3x16x16xf32>
    %35 = arith.addf %31, %34 : vector<1x3x16x16xf32>
    %36 = vector.extract_strided_slice %28 {offsets = [0, 0, 2, 0], sizes = [1, 3, 16, 16], strides = [1, 1, 1, 1]} : vector<1x3x20x16xf32> to vector<1x3x16x16xf32>
    %cst_15 = arith.constant 0.402619958 : f32
    %37 = vector.broadcast %cst_15 : f32 to vector<1x3x16x16xf32>
    %38 = arith.mulf %37, %36 : vector<1x3x16x16xf32>
    %39 = arith.addf %35, %38 : vector<1x3x16x16xf32>
    %40 = vector.extract_strided_slice %28 {offsets = [0, 0, 3, 0], sizes = [1, 3, 16, 16], strides = [1, 1, 1, 1]} : vector<1x3x20x16xf32> to vector<1x3x16x16xf32>
    %cst_16 = arith.constant 0.244201347 : f32
    %41 = vector.broadcast %cst_16 : f32 to vector<1x3x16x16xf32>
    %42 = arith.mulf %41, %40 : vector<1x3x16x16xf32>
    %43 = arith.addf %39, %42 : vector<1x3x16x16xf32>
    %44 = vector.extract_strided_slice %28 {offsets = [0, 0, 4, 0], sizes = [1, 3, 16, 16], strides = [1, 1, 1, 1]} : vector<1x3x20x16xf32> to vector<1x3x16x16xf32>
    %cst_17 = arith.constant 0.054488685 : f32
    %45 = vector.broadcast %cst_17 : f32 to vector<1x3x16x16xf32>
    %46 = arith.mulf %45, %44 : vector<1x3x16x16xf32>
    %47 = arith.addf %43, %46 : vector<1x3x16x16xf32>
    %cst_18 = arith.constant 0.000000e+00 : f32
    %48 = vector.broadcast %cst_18 : f32 to vector<1x3x16x2xf32>
    %49 = tpu.concatenate %48, %1, %48 in 3 : vector<1x3x16x2xf32>, vector<1x3x16x16xf32>, vector<1x3x16x2xf32> -> vector<1x3x16x20xf32>
    %50 = vector.extract_strided_slice %49 {offsets = [0, 0, 0, 0], sizes = [1, 3, 16, 16], strides = [1, 1, 1, 1]} : vector<1x3x16x20xf32> to vector<1x3x16x16xf32>
    %cst_19 = arith.constant 0.054488685 : f32
    %51 = vector.broadcast %cst_19 : f32 to vector<1x3x16x16xf32>
    %52 = arith.mulf %51, %50 : vector<1x3x16x16xf32>
    %53 = vector.extract_strided_slice %49 {offsets = [0, 0, 0, 1], sizes = [1, 3, 16, 16], strides = [1, 1, 1, 1]} : vector<1x3x16x20xf32> to vector<1x3x16x16xf32>
    %cst_20 = arith.constant 0.244201347 : f32
    %54 = vector.broadcast %cst_20 : f32 to vector<1x3x16x16xf32>
    %55 = arith.mulf %54, %53 : vector<1x3x16x16xf32>
    %56 = arith.addf %52, %55 : vector<1x3x16x16xf32>
    %57 = vector.extract_strided_slice %49 {offsets = [0, 0, 0, 2], sizes = [1, 3, 16, 16], strides = [1, 1, 1, 1]} : vector<1x3x16x20xf32> to vector<1x3x16x16xf32>
    %cst_21 = arith.constant 0.402619958 : f32
    %58 = vector.broadcast %cst_21 : f32 to vector<1x3x16x16xf32>
    %59 = arith.mulf %58, %57 : vector<1x3x16x16xf32>
    %60 = arith.addf %56, %59 : vector<1x3x16x16xf32>
    %61 = vector.extract_strided_slice %49 {offsets = [0, 0, 0, 3], sizes = [1, 3, 16, 16], strides = [1, 1, 1, 1]} : vector<1x3x16x20xf32> to vector<1x3x16x16xf32>
    %cst_22 = arith.constant 0.244201347 : f32
    %62 = vector.broadcast %cst_22 : f32 to vector<1x3x16x16xf32>
    %63 = arith.mulf %62, %61 : vector<1x3x16x16xf32>
    %64 = arith.addf %60, %63 : vector<1x3x16x16xf32>
    %65 = vector.extract_strided_slice %49 {offsets = [0, 0, 0, 4], sizes = [1, 3, 16, 16], strides = [1, 1, 1, 1]} : vector<1x3x16x20xf32> to vector<1x3x16x16xf32>
    %cst_23 = arith.constant 0.054488685 : f32
    %66 = vector.broadcast %cst_23 : f32 to vector<1x3x16x16xf32>
    %67 = arith.mulf %66, %65 : vector<1x3x16x16xf32>
    %68 = arith.addf %64, %67 : vector<1x3x16x16xf32>
    %cst_24 = arith.constant 0.000000e+00 : f32
    %69 = vector.broadcast %cst_24 : f32 to vector<1x3x2x16xf32>
    %70 = tpu.concatenate %69, %68, %69 in 2 : vector<1x3x2x16xf32>, vector<1x3x16x16xf32>, vector<1x3x2x16xf32> -> vector<1x3x20x16xf32>
    %71 = vector.extract_strided_slice %70 {offsets = [0, 0, 0, 0], sizes = [1, 3, 16, 16], strides = [1, 1, 1, 1]} : vector<1x3x20x16xf32> to vector<1x3x16x16xf32>
    %cst_25 = arith.constant 0.054488685 : f32
    %72 = vector.broadcast %cst_25 : f32 to vector<1x3x16x16xf32>
    %73 = arith.mulf %72, %71 : vector<1x3x16x16xf32>
    %74 = vector.extract_strided_slice %70 {offsets = [0, 0, 1, 0], sizes = [1, 3, 16, 16], strides = [1, 1, 1, 1]} : vector<1x3x20x16xf32> to vector<1x3x16x16xf32>
    %cst_26 = arith.constant 0.244201347 : f32
    %75 = vector.broadcast %cst_26 : f32 to vector<1x3x16x16xf32>
    %76 = arith.mulf %75, %74 : vector<1x3x16x16xf32>
    %77 = arith.addf %73, %76 : vector<1x3x16x16xf32>
    %78 = vector.extract_strided_slice %70 {offsets = [0, 0, 2, 0], sizes = [1, 3, 16, 16], strides = [1, 1, 1, 1]} : vector<1x3x20x16xf32> to vector<1x3x16x16xf32>
    %cst_27 = arith.constant 0.402619958 : f32
    %79 = vector.broadcast %cst_27 : f32 to vector<1x3x16x16xf32>
    %80 = arith.mulf %79, %78 : vector<1x3x16x16xf32>
    %81 = arith.addf %77, %80 : vector<1x3x16x16xf32>
    %82 = vector.extract_strided_slice %70 {offsets = [0, 0, 3, 0], sizes = [1, 3, 16, 16], strides = [1, 1, 1, 1]} : vector<1x3x20x16xf32> to vector<1x3x16x16xf32>
    %cst_28 = arith.constant 0.244201347 : f32
    %83 = vector.broadcast %cst_28 : f32 to vector<1x3x16x16xf32>
    %84 = arith.mulf %83, %82 : vector<1x3x16x16xf32>
    %85 = arith.addf %81, %84 : vector<1x3x16x16xf32>
    %86 = vector.extract_strided_slice %70 {offsets = [0, 0, 4, 0], sizes = [1, 3, 16, 16], strides = [1, 1, 1, 1]} : vector<1x3x20x16xf32> to vector<1x3x16x16xf32>
    %cst_29 = arith.constant 0.054488685 : f32
    %87 = vector.broadcast %cst_29 : f32 to vector<1x3x16x16xf32>
    %88 = arith.mulf %87, %86 : vector<1x3x16x16xf32>
    %89 = arith.addf %85, %88 : vector<1x3x16x16xf32>
    %c1_i32 = arith.constant 1 : i32
    %90 = vector.broadcast %c1_i32 : i32 to vector<1x3x16x16xi32>
    %91 = arith.andi %2, %90 : vector<1x3x16x16xi32>
    %c0_i32 = arith.constant 0 : i32
    %92 = vector.broadcast %c0_i32 : i32 to vector<1x3x16x16xi32>
    %93 = arith.cmpi eq, %91, %92 : vector<1x3x16x16xi32>
    %c1_i32_30 = arith.constant 1 : i32
    %94 = vector.broadcast %c1_i32_30 : i32 to vector<1x3x16x16xi32>
    %95 = arith.andi %3, %94 : vector<1x3x16x16xi32>
    %c0_i32_31 = arith.constant 0 : i32
    %96 = vector.broadcast %c0_i32_31 : i32 to vector<1x3x16x16xi32>
    %97 = arith.cmpi eq, %95, %96 : vector<1x3x16x16xi32>
    %98 = vector.extract_strided_slice %47 {offsets = [0, 0, 0, 0], sizes = [1, 3, 16, 1], strides = [1, 1, 1, 1]} : vector<1x3x16x16xf32> to vector<1x3x16x1xf32>
    %99 = vector.extract_strided_slice %47 {offsets = [0, 0, 0, 0], sizes = [1, 3, 16, 15], strides = [1, 1, 1, 1]} : vector<1x3x16x16xf32> to vector<1x3x16x15xf32>
    %100 = tpu.concatenate %98, %99 in 3 : vector<1x3x16x1xf32>, vector<1x3x16x15xf32> -> vector<1x3x16x16xf32>
    %101 = arith.select %97, %47, %100 : vector<1x3x16x16xi1>, vector<1x3x16x16xf32>
    %102 = vector.extract_strided_slice %101 {offsets = [0, 0, 0, 0], sizes = [1, 3, 1, 16], strides = [1, 1, 1, 1]} : vector<1x3x16x16xf32> to vector<1x3x1x16xf32>
    %103 = vector.extract_strided_slice %101 {offsets = [0, 0, 0, 0], sizes = [1, 3, 15, 16], strides = [1, 1, 1, 1]} : vector<1x3x16x16xf32> to vector<1x3x15x16xf32>
    %104 = tpu.concatenate %102, %103 in 2 : vector<1x3x1x16xf32>, vector<1x3x15x16xf32> -> vector<1x3x16x16xf32>
    %105 = arith.select %93, %101, %104 : vector<1x3x16x16xi1>, vector<1x3x16x16xf32>
    %106 = arith.subf %0, %105 : vector<1x3x16x16xf32>
    %107 = math.absf %106 : vector<1x3x16x16xf32>
    %cst_32 = arith.constant dense<0.000000e+00> : vector<1x16x16xf32>
    %108 = vector.multi_reduction <add>, %107, %cst_32 [1] : vector<1x3x16x16xf32> to vector<1x16x16xf32>
    %cst_33 = arith.constant 3.000000e+00 : f32
    %109 = vector.broadcast %cst_33 : f32 to vector<1x16x16xf32>
    %110 = arith.divf %108, %109 : vector<1x16x16xf32>
    %111 = vector.extract_strided_slice %89 {offsets = [0, 0, 0, 0], sizes = [1, 3, 16, 1], strides = [1, 1, 1, 1]} : vector<1x3x16x16xf32> to vector<1x3x16x1xf32>
    %112 = vector.extract_strided_slice %89 {offsets = [0, 0, 0, 0], sizes = [1, 3, 16, 15], strides = [1, 1, 1, 1]} : vector<1x3x16x16xf32> to vector<1x3x16x15xf32>
    %113 = tpu.concatenate %111, %112 in 3 : vector<1x3x16x1xf32>, vector<1x3x16x15xf32> -> vector<1x3x16x16xf32>
    %114 = arith.select %97, %89, %113 : vector<1x3x16x16xi1>, vector<1x3x16x16xf32>
    %115 = vector.extract_strided_slice %114 {offsets = [0, 0, 0, 0], sizes = [1, 3, 1, 16], strides = [1, 1, 1, 1]} : vector<1x3x16x16xf32> to vector<1x3x1x16xf32>
    %116 = vector.extract_strided_slice %114 {offsets = [0, 0, 0, 0], sizes = [1, 3, 15, 16], strides = [1, 1, 1, 1]} : vector<1x3x16x16xf32> to vector<1x3x15x16xf32>
    %117 = tpu.concatenate %115, %116 in 2 : vector<1x3x1x16xf32>, vector<1x3x15x16xf32> -> vector<1x3x16x16xf32>
    %118 = arith.select %93, %114, %117 : vector<1x3x16x16xi1>, vector<1x3x16x16xf32>
    %119 = arith.subf %1, %118 : vector<1x3x16x16xf32>
    %120 = math.absf %119 : vector<1x3x16x16xf32>
    %cst_34 = arith.constant dense<0.000000e+00> : vector<1x16x16xf32>
    %121 = vector.multi_reduction <add>, %120, %cst_34 [1] : vector<1x3x16x16xf32> to vector<1x16x16xf32>
    %cst_35 = arith.constant 3.000000e+00 : f32
    %122 = vector.broadcast %cst_35 : f32 to vector<1x16x16xf32>
    %123 = arith.divf %121, %122 : vector<1x16x16xf32>
    %124 = arith.subf %110, %123 : vector<1x16x16xf32>
    %125 = math.absf %124 : vector<1x16x16xf32>
    %126 = vector.shape_cast %125 : vector<1x16x16xf32> to vector<1x1x16x16xf32>
    %cst_36 = arith.constant dense<0.000000e+00> : vector<1xf32>
    %127 = vector.multi_reduction <add>, %126, %cst_36 [1, 2, 3] : vector<1x1x16x16xf32> to vector<1xf32>
    %128 = vector.shape_cast %127 : vector<1xf32> to vector<1x1x1x1xf32>
    %129 = vector.extract %128[0, 0, 0, 0] : f32 from vector<1x1x1x1xf32>
    %cst_37 = arith.constant 2.560000e+02 : f32
    %130 = arith.divf %129, %cst_37 : f32
    %cst_38 = arith.constant 0.000000e+00 : f32
    %131 = arith.addf %cst_38, %130 : f32
    %cst_39 = arith.constant 0.000000e+00 : f32
    %132 = vector.broadcast %cst_39 : f32 to vector<1x3x16x4xf32>
    %133 = tpu.concatenate %132, %47, %132 in 3 : vector<1x3x16x4xf32>, vector<1x3x16x16xf32>, vector<1x3x16x4xf32> -> vector<1x3x16x24xf32>
    %134 = vector.extract_strided_slice %133 {offsets = [0, 0, 0, 0], sizes = [1, 3, 16, 16], strides = [1, 1, 1, 1]} : vector<1x3x16x24xf32> to vector<1x3x16x16xf32>
    %cst_40 = arith.constant 0.054488685 : f32
    %135 = vector.broadcast %cst_40 : f32 to vector<1x3x16x16xf32>
    %136 = arith.mulf %135, %134 : vector<1x3x16x16xf32>
    %137 = vector.extract_strided_slice %133 {offsets = [0, 0, 0, 2], sizes = [1, 3, 16, 16], strides = [1, 1, 1, 1]} : vector<1x3x16x24xf32> to vector<1x3x16x16xf32>
    %cst_41 = arith.constant 0.244201347 : f32
    %138 = vector.broadcast %cst_41 : f32 to vector<1x3x16x16xf32>
    %139 = arith.mulf %138, %137 : vector<1x3x16x16xf32>
    %140 = arith.addf %136, %139 : vector<1x3x16x16xf32>
    %141 = vector.extract_strided_slice %133 {offsets = [0, 0, 0, 4], sizes = [1, 3, 16, 16], strides = [1, 1, 1, 1]} : vector<1x3x16x24xf32> to vector<1x3x16x16xf32>
    %cst_42 = arith.constant 0.402619958 : f32
    %142 = vector.broadcast %cst_42 : f32 to vector<1x3x16x16xf32>
    %143 = arith.mulf %142, %141 : vector<1x3x16x16xf32>
    %144 = arith.addf %140, %143 : vector<1x3x16x16xf32>
    %145 = vector.extract_strided_slice %133 {offsets = [0, 0, 0, 6], sizes = [1, 3, 16, 16], strides = [1, 1, 1, 1]} : vector<1x3x16x24xf32> to vector<1x3x16x16xf32>
    %cst_43 = arith.constant 0.244201347 : f32
    %146 = vector.broadcast %cst_43 : f32 to vector<1x3x16x16xf32>
    %147 = arith.mulf %146, %145 : vector<1x3x16x16xf32>
    %148 = arith.addf %144, %147 : vector<1x3x16x16xf32>
    %149 = vector.extract_strided_slice %133 {offsets = [0, 0, 0, 8], sizes = [1, 3, 16, 16], strides = [1, 1, 1, 1]} : vector<1x3x16x24xf32> to vector<1x3x16x16xf32>
    %cst_44 = arith.constant 0.054488685 : f32
    %150 = vector.broadcast %cst_44 : f32 to vector<1x3x16x16xf32>
    %151 = arith.mulf %150, %149 : vector<1x3x16x16xf32>
    %152 = arith.addf %148, %151 : vector<1x3x16x16xf32>
    %cst_45 = arith.constant 0.000000e+00 : f32
    %153 = vector.broadcast %cst_45 : f32 to vector<1x3x4x16xf32>
    %154 = tpu.concatenate %153, %152, %153 in 2 : vector<1x3x4x16xf32>, vector<1x3x16x16xf32>, vector<1x3x4x16xf32> -> vector<1x3x24x16xf32>
    %155 = vector.extract_strided_slice %154 {offsets = [0, 0, 0, 0], sizes = [1, 3, 16, 16], strides = [1, 1, 1, 1]} : vector<1x3x24x16xf32> to vector<1x3x16x16xf32>
    %cst_46 = arith.constant 0.054488685 : f32
    %156 = vector.broadcast %cst_46 : f32 to vector<1x3x16x16xf32>
    %157 = arith.mulf %156, %155 : vector<1x3x16x16xf32>
    %158 = vector.extract_strided_slice %154 {offsets = [0, 0, 2, 0], sizes = [1, 3, 16, 16], strides = [1, 1, 1, 1]} : vector<1x3x24x16xf32> to vector<1x3x16x16xf32>
    %cst_47 = arith.constant 0.244201347 : f32
    %159 = vector.broadcast %cst_47 : f32 to vector<1x3x16x16xf32>
    %160 = arith.mulf %159, %158 : vector<1x3x16x16xf32>
    %161 = arith.addf %157, %160 : vector<1x3x16x16xf32>
    %162 = vector.extract_strided_slice %154 {offsets = [0, 0, 4, 0], sizes = [1, 3, 16, 16], strides = [1, 1, 1, 1]} : vector<1x3x24x16xf32> to vector<1x3x16x16xf32>
    %cst_48 = arith.constant 0.402619958 : f32
    %163 = vector.broadcast %cst_48 : f32 to vector<1x3x16x16xf32>
    %164 = arith.mulf %163, %162 : vector<1x3x16x16xf32>
    %165 = arith.addf %161, %164 : vector<1x3x16x16xf32>
    %166 = vector.extract_strided_slice %154 {offsets = [0, 0, 6, 0], sizes = [1, 3, 16, 16], strides = [1, 1, 1, 1]} : vector<1x3x24x16xf32> to vector<1x3x16x16xf32>
    %cst_49 = arith.constant 0.244201347 : f32
    %167 = vector.broadcast %cst_49 : f32 to vector<1x3x16x16xf32>
    %168 = arith.mulf %167, %166 : vector<1x3x16x16xf32>
    %169 = arith.addf %165, %168 : vector<1x3x16x16xf32>
    %170 = vector.extract_strided_slice %154 {offsets = [0, 0, 8, 0], sizes = [1, 3, 16, 16], strides = [1, 1, 1, 1]} : vector<1x3x24x16xf32> to vector<1x3x16x16xf32>
    %cst_50 = arith.constant 0.054488685 : f32
    %171 = vector.broadcast %cst_50 : f32 to vector<1x3x16x16xf32>
    %172 = arith.mulf %171, %170 : vector<1x3x16x16xf32>
    %173 = arith.addf %169, %172 : vector<1x3x16x16xf32>
    %cst_51 = arith.constant 0.000000e+00 : f32
    %174 = vector.broadcast %cst_51 : f32 to vector<1x3x16x4xf32>
    %175 = tpu.concatenate %174, %89, %174 in 3 : vector<1x3x16x4xf32>, vector<1x3x16x16xf32>, vector<1x3x16x4xf32> -> vector<1x3x16x24xf32>
    %176 = vector.extract_strided_slice %175 {offsets = [0, 0, 0, 0], sizes = [1, 3, 16, 16], strides = [1, 1, 1, 1]} : vector<1x3x16x24xf32> to vector<1x3x16x16xf32>
    %cst_52 = arith.constant 0.054488685 : f32
    %177 = vector.broadcast %cst_52 : f32 to vector<1x3x16x16xf32>
    %178 = arith.mulf %177, %176 : vector<1x3x16x16xf32>
    %179 = vector.extract_strided_slice %175 {offsets = [0, 0, 0, 2], sizes = [1, 3, 16, 16], strides = [1, 1, 1, 1]} : vector<1x3x16x24xf32> to vector<1x3x16x16xf32>
    %cst_53 = arith.constant 0.244201347 : f32
    %180 = vector.broadcast %cst_53 : f32 to vector<1x3x16x16xf32>
    %181 = arith.mulf %180, %179 : vector<1x3x16x16xf32>
    %182 = arith.addf %178, %181 : vector<1x3x16x16xf32>
    %183 = vector.extract_strided_slice %175 {offsets = [0, 0, 0, 4], sizes = [1, 3, 16, 16], strides = [1, 1, 1, 1]} : vector<1x3x16x24xf32> to vector<1x3x16x16xf32>
    %cst_54 = arith.constant 0.402619958 : f32
    %184 = vector.broadcast %cst_54 : f32 to vector<1x3x16x16xf32>
    %185 = arith.mulf %184, %183 : vector<1x3x16x16xf32>
    %186 = arith.addf %182, %185 : vector<1x3x16x16xf32>
    %187 = vector.extract_strided_slice %175 {offsets = [0, 0, 0, 6], sizes = [1, 3, 16, 16], strides = [1, 1, 1, 1]} : vector<1x3x16x24xf32> to vector<1x3x16x16xf32>
    %cst_55 = arith.constant 0.244201347 : f32
    %188 = vector.broadcast %cst_55 : f32 to vector<1x3x16x16xf32>
    %189 = arith.mulf %188, %187 : vector<1x3x16x16xf32>
    %190 = arith.addf %186, %189 : vector<1x3x16x16xf32>
    %191 = vector.extract_strided_slice %175 {offsets = [0, 0, 0, 8], sizes = [1, 3, 16, 16], strides = [1, 1, 1, 1]} : vector<1x3x16x24xf32> to vector<1x3x16x16xf32>
    %cst_56 = arith.constant 0.054488685 : f32
    %192 = vector.broadcast %cst_56 : f32 to vector<1x3x16x16xf32>
    %193 = arith.mulf %192, %191 : vector<1x3x16x16xf32>
    %194 = arith.addf %190, %193 : vector<1x3x16x16xf32>
    %cst_57 = arith.constant 0.000000e+00 : f32
    %195 = vector.broadcast %cst_57 : f32 to vector<1x3x4x16xf32>
    %196 = tpu.concatenate %195, %194, %195 in 2 : vector<1x3x4x16xf32>, vector<1x3x16x16xf32>, vector<1x3x4x16xf32> -> vector<1x3x24x16xf32>
    %197 = vector.extract_strided_slice %196 {offsets = [0, 0, 0, 0], sizes = [1, 3, 16, 16], strides = [1, 1, 1, 1]} : vector<1x3x24x16xf32> to vector<1x3x16x16xf32>
    %cst_58 = arith.constant 0.054488685 : f32
    %198 = vector.broadcast %cst_58 : f32 to vector<1x3x16x16xf32>
    %199 = arith.mulf %198, %197 : vector<1x3x16x16xf32>
    %200 = vector.extract_strided_slice %196 {offsets = [0, 0, 2, 0], sizes = [1, 3, 16, 16], strides = [1, 1, 1, 1]} : vector<1x3x24x16xf32> to vector<1x3x16x16xf32>
    %cst_59 = arith.constant 0.244201347 : f32
    %201 = vector.broadcast %cst_59 : f32 to vector<1x3x16x16xf32>
    %202 = arith.mulf %201, %200 : vector<1x3x16x16xf32>
    %203 = arith.addf %199, %202 : vector<1x3x16x16xf32>
    %204 = vector.extract_strided_slice %196 {offsets = [0, 0, 4, 0], sizes = [1, 3, 16, 16], strides = [1, 1, 1, 1]} : vector<1x3x24x16xf32> to vector<1x3x16x16xf32>
    %cst_60 = arith.constant 0.402619958 : f32
    %205 = vector.broadcast %cst_60 : f32 to vector<1x3x16x16xf32>
    %206 = arith.mulf %205, %204 : vector<1x3x16x16xf32>
    %207 = arith.addf %203, %206 : vector<1x3x16x16xf32>
    %208 = vector.extract_strided_slice %196 {offsets = [0, 0, 6, 0], sizes = [1, 3, 16, 16], strides = [1, 1, 1, 1]} : vector<1x3x24x16xf32> to vector<1x3x16x16xf32>
    %cst_61 = arith.constant 0.244201347 : f32
    %209 = vector.broadcast %cst_61 : f32 to vector<1x3x16x16xf32>
    %210 = arith.mulf %209, %208 : vector<1x3x16x16xf32>
    %211 = arith.addf %207, %210 : vector<1x3x16x16xf32>
    %212 = vector.extract_strided_slice %196 {offsets = [0, 0, 8, 0], sizes = [1, 3, 16, 16], strides = [1, 1, 1, 1]} : vector<1x3x24x16xf32> to vector<1x3x16x16xf32>
    %cst_62 = arith.constant 0.054488685 : f32
    %213 = vector.broadcast %cst_62 : f32 to vector<1x3x16x16xf32>
    %214 = arith.mulf %213, %212 : vector<1x3x16x16xf32>
    %215 = arith.addf %211, %214 : vector<1x3x16x16xf32>
    %c2_i32 = arith.constant 2 : i32
    %216 = vector.broadcast %c2_i32 : i32 to vector<1x3x16x16xi32>
    %217 = arith.andi %2, %216 : vector<1x3x16x16xi32>
    %c0_i32_63 = arith.constant 0 : i32
    %218 = vector.broadcast %c0_i32_63 : i32 to vector<1x3x16x16xi32>
    %219 = arith.cmpi eq, %217, %218 : vector<1x3x16x16xi32>
    %c2_i32_64 = arith.constant 2 : i32
    %220 = vector.broadcast %c2_i32_64 : i32 to vector<1x3x16x16xi32>
    %221 = arith.andi %3, %220 : vector<1x3x16x16xi32>
    %c0_i32_65 = arith.constant 0 : i32
    %222 = vector.broadcast %c0_i32_65 : i32 to vector<1x3x16x16xi32>
    %223 = arith.cmpi eq, %221, %222 : vector<1x3x16x16xi32>
    %224 = vector.extract_strided_slice %173 {offsets = [0, 0, 0, 0], sizes = [1, 3, 16, 2], strides = [1, 1, 1, 1]} : vector<1x3x16x16xf32> to vector<1x3x16x2xf32>
    %225 = vector.extract_strided_slice %173 {offsets = [0, 0, 0, 0], sizes = [1, 3, 16, 14], strides = [1, 1, 1, 1]} : vector<1x3x16x16xf32> to vector<1x3x16x14xf32>
    %226 = tpu.concatenate %224, %225 in 3 : vector<1x3x16x2xf32>, vector<1x3x16x14xf32> -> vector<1x3x16x16xf32>
    %227 = arith.select %223, %173, %226 : vector<1x3x16x16xi1>, vector<1x3x16x16xf32>
    %228 = vector.extract_strided_slice %227 {offsets = [0, 0, 0, 0], sizes = [1, 3, 2, 16], strides = [1, 1, 1, 1]} : vector<1x3x16x16xf32> to vector<1x3x2x16xf32>
    %229 = vector.extract_strided_slice %227 {offsets = [0, 0, 0, 0], sizes = [1, 3, 14, 16], strides = [1, 1, 1, 1]} : vector<1x3x16x16xf32> to vector<1x3x14x16xf32>
    %230 = tpu.concatenate %228, %229 in 2 : vector<1x3x2x16xf32>, vector<1x3x14x16xf32> -> vector<1x3x16x16xf32>
    %231 = arith.select %219, %227, %230 : vector<1x3x16x16xi1>, vector<1x3x16x16xf32>
    %232 = arith.subf %47, %231 : vector<1x3x16x16xf32>
    %233 = math.absf %232 : vector<1x3x16x16xf32>
    %cst_66 = arith.constant dense<0.000000e+00> : vector<1x16x16xf32>
    %234 = vector.multi_reduction <add>, %233, %cst_66 [1] : vector<1x3x16x16xf32> to vector<1x16x16xf32>
    %cst_67 = arith.constant 3.000000e+00 : f32
    %235 = vector.broadcast %cst_67 : f32 to vector<1x16x16xf32>
    %236 = arith.divf %234, %235 : vector<1x16x16xf32>
    %237 = vector.extract_strided_slice %215 {offsets = [0, 0, 0, 0], sizes = [1, 3, 16, 2], strides = [1, 1, 1, 1]} : vector<1x3x16x16xf32> to vector<1x3x16x2xf32>
    %238 = vector.extract_strided_slice %215 {offsets = [0, 0, 0, 0], sizes = [1, 3, 16, 14], strides = [1, 1, 1, 1]} : vector<1x3x16x16xf32> to vector<1x3x16x14xf32>
    %239 = tpu.concatenate %237, %238 in 3 : vector<1x3x16x2xf32>, vector<1x3x16x14xf32> -> vector<1x3x16x16xf32>
    %240 = arith.select %223, %215, %239 : vector<1x3x16x16xi1>, vector<1x3x16x16xf32>
    %241 = vector.extract_strided_slice %240 {offsets = [0, 0, 0, 0], sizes = [1, 3, 2, 16], strides = [1, 1, 1, 1]} : vector<1x3x16x16xf32> to vector<1x3x2x16xf32>
    %242 = vector.extract_strided_slice %240 {offsets = [0, 0, 0, 0], sizes = [1, 3, 14, 16], strides = [1, 1, 1, 1]} : vector<1x3x16x16xf32> to vector<1x3x14x16xf32>
    %243 = tpu.concatenate %241, %242 in 2 : vector<1x3x2x16xf32>, vector<1x3x14x16xf32> -> vector<1x3x16x16xf32>
    %244 = arith.select %219, %240, %243 : vector<1x3x16x16xi1>, vector<1x3x16x16xf32>
    %245 = arith.subf %89, %244 : vector<1x3x16x16xf32>
    %246 = math.absf %245 : vector<1x3x16x16xf32>
    %cst_68 = arith.constant dense<0.000000e+00> : vector<1x16x16xf32>
    %247 = vector.multi_reduction <add>, %246, %cst_68 [1] : vector<1x3x16x16xf32> to vector<1x16x16xf32>
    %cst_69 = arith.constant 3.000000e+00 : f32
    %248 = vector.broadcast %cst_69 : f32 to vector<1x16x16xf32>
    %249 = arith.divf %247, %248 : vector<1x16x16xf32>
    %250 = arith.subf %236, %249 : vector<1x16x16xf32>
    %251 = math.absf %250 : vector<1x16x16xf32>
    %c1_i32_70 = arith.constant 1 : i32
    %252 = vector.broadcast %c1_i32_70 : i32 to vector<1x16x16xi32>
    %253 = arith.andi %4, %252 : vector<1x16x16xi32>
    %c0_i32_71 = arith.constant 0 : i32
    %254 = vector.broadcast %c0_i32_71 : i32 to vector<1x16x16xi32>
    %255 = arith.cmpi eq, %253, %254 : vector<1x16x16xi32>
    %c1_i32_72 = arith.constant 1 : i32
    %256 = vector.broadcast %c1_i32_72 : i32 to vector<1x16x16xi32>
    %257 = arith.andi %5, %256 : vector<1x16x16xi32>
    %c0_i32_73 = arith.constant 0 : i32
    %258 = vector.broadcast %c0_i32_73 : i32 to vector<1x16x16xi32>
    %259 = arith.cmpi eq, %257, %258 : vector<1x16x16xi32>
    %260 = arith.andi %255, %259 : vector<1x16x16xi1>
    %cst_74 = arith.constant 0.000000e+00 : f32
    %261 = vector.broadcast %cst_74 : f32 to vector<1x16x16xf32>
    %262 = arith.select %260, %251, %261 : vector<1x16x16xi1>, vector<1x16x16xf32>
    %263 = vector.shape_cast %262 : vector<1x16x16xf32> to vector<1x1x16x16xf32>
    %cst_75 = arith.constant dense<0.000000e+00> : vector<1xf32>
    %264 = vector.multi_reduction <add>, %263, %cst_75 [1, 2, 3] : vector<1x1x16x16xf32> to vector<1xf32>
    %265 = vector.shape_cast %264 : vector<1xf32> to vector<1x1x1x1xf32>
    %266 = vector.extract %265[0, 0, 0, 0] : f32 from vector<1x1x1x1xf32>
    %cst_76 = arith.constant 6.400000e+01 : f32
    %267 = arith.divf %266, %cst_76 : f32
    %268 = arith.addf %131, %267 : f32
    %cst_77 = arith.constant 0.000000e+00 : f32
    %269 = vector.broadcast %cst_77 : f32 to vector<1x3x16x8xf32>
    %270 = tpu.concatenate %269, %173, %269 in 3 : vector<1x3x16x8xf32>, vector<1x3x16x16xf32>, vector<1x3x16x8xf32> -> vector<1x3x16x32xf32>
    %271 = vector.extract_strided_slice %270 {offsets = [0, 0, 0, 0], sizes = [1, 3, 16, 16], strides = [1, 1, 1, 1]} : vector<1x3x16x32xf32> to vector<1x3x16x16xf32>
    %cst_78 = arith.constant 0.054488685 : f32
    %272 = vector.broadcast %cst_78 : f32 to vector<1x3x16x16xf32>
    %273 = arith.mulf %272, %271 : vector<1x3x16x16xf32>
    %274 = vector.extract_strided_slice %270 {offsets = [0, 0, 0, 4], sizes = [1, 3, 16, 16], strides = [1, 1, 1, 1]} : vector<1x3x16x32xf32> to vector<1x3x16x16xf32>
    %cst_79 = arith.constant 0.244201347 : f32
    %275 = vector.broadcast %cst_79 : f32 to vector<1x3x16x16xf32>
    %276 = arith.mulf %275, %274 : vector<1x3x16x16xf32>
    %277 = arith.addf %273, %276 : vector<1x3x16x16xf32>
    %278 = vector.extract_strided_slice %270 {offsets = [0, 0, 0, 8], sizes = [1, 3, 16, 16], strides = [1, 1, 1, 1]} : vector<1x3x16x32xf32> to vector<1x3x16x16xf32>
    %cst_80 = arith.constant 0.402619958 : f32
    %279 = vector.broadcast %cst_80 : f32 to vector<1x3x16x16xf32>
    %280 = arith.mulf %279, %278 : vector<1x3x16x16xf32>
    %281 = arith.addf %277, %280 : vector<1x3x16x16xf32>
    %282 = vector.extract_strided_slice %270 {offsets = [0, 0, 0, 12], sizes = [1, 3, 16, 16], strides = [1, 1, 1, 1]} : vector<1x3x16x32xf32> to vector<1x3x16x16xf32>
    %cst_81 = arith.constant 0.244201347 : f32
    %283 = vector.broadcast %cst_81 : f32 to vector<1x3x16x16xf32>
    %284 = arith.mulf %283, %282 : vector<1x3x16x16xf32>
    %285 = arith.addf %281, %284 : vector<1x3x16x16xf32>
    %286 = vector.extract_strided_slice %270 {offsets = [0, 0, 0, 16], sizes = [1, 3, 16, 16], strides = [1, 1, 1, 1]} : vector<1x3x16x32xf32> to vector<1x3x16x16xf32>
    %cst_82 = arith.constant 0.054488685 : f32
    %287 = vector.broadcast %cst_82 : f32 to vector<1x3x16x16xf32>
    %288 = arith.mulf %287, %286 : vector<1x3x16x16xf32>
    %289 = arith.addf %285, %288 : vector<1x3x16x16xf32>
    %cst_83 = arith.constant 0.000000e+00 : f32
    %290 = vector.broadcast %cst_83 : f32 to vector<1x3x8x16xf32>
    %291 = tpu.concatenate %290, %289, %290 in 2 : vector<1x3x8x16xf32>, vector<1x3x16x16xf32>, vector<1x3x8x16xf32> -> vector<1x3x32x16xf32>
    %292 = vector.extract_strided_slice %291 {offsets = [0, 0, 0, 0], sizes = [1, 3, 16, 16], strides = [1, 1, 1, 1]} : vector<1x3x32x16xf32> to vector<1x3x16x16xf32>
    %cst_84 = arith.constant 0.054488685 : f32
    %293 = vector.broadcast %cst_84 : f32 to vector<1x3x16x16xf32>
    %294 = arith.mulf %293, %292 : vector<1x3x16x16xf32>
    %295 = vector.extract_strided_slice %291 {offsets = [0, 0, 4, 0], sizes = [1, 3, 16, 16], strides = [1, 1, 1, 1]} : vector<1x3x32x16xf32> to vector<1x3x16x16xf32>
    %cst_85 = arith.constant 0.244201347 : f32
    %296 = vector.broadcast %cst_85 : f32 to vector<1x3x16x16xf32>
    %297 = arith.mulf %296, %295 : vector<1x3x16x16xf32>
    %298 = arith.addf %294, %297 : vector<1x3x16x16xf32>
    %299 = vector.extract_strided_slice %291 {offsets = [0, 0, 8, 0], sizes = [1, 3, 16, 16], strides = [1, 1, 1, 1]} : vector<1x3x32x16xf32> to vector<1x3x16x16xf32>
    %cst_86 = arith.constant 0.402619958 : f32
    %300 = vector.broadcast %cst_86 : f32 to vector<1x3x16x16xf32>
    %301 = arith.mulf %300, %299 : vector<1x3x16x16xf32>
    %302 = arith.addf %298, %301 : vector<1x3x16x16xf32>
    %303 = vector.extract_strided_slice %291 {offsets = [0, 0, 12, 0], sizes = [1, 3, 16, 16], strides = [1, 1, 1, 1]} : vector<1x3x32x16xf32> to vector<1x3x16x16xf32>
    %cst_87 = arith.constant 0.244201347 : f32
    %304 = vector.broadcast %cst_87 : f32 to vector<1x3x16x16xf32>
    %305 = arith.mulf %304, %303 : vector<1x3x16x16xf32>
    %306 = arith.addf %302, %305 : vector<1x3x16x16xf32>
    %307 = vector.extract_strided_slice %291 {offsets = [0, 0, 16, 0], sizes = [1, 3, 16, 16], strides = [1, 1, 1, 1]} : vector<1x3x32x16xf32> to vector<1x3x16x16xf32>
    %cst_88 = arith.constant 0.054488685 : f32
    %308 = vector.broadcast %cst_88 : f32 to vector<1x3x16x16xf32>
    %309 = arith.mulf %308, %307 : vector<1x3x16x16xf32>
    %310 = arith.addf %306, %309 : vector<1x3x16x16xf32>
    %cst_89 = arith.constant 0.000000e+00 : f32
    %311 = vector.broadcast %cst_89 : f32 to vector<1x3x16x8xf32>
    %312 = tpu.concatenate %311, %215, %311 in 3 : vector<1x3x16x8xf32>, vector<1x3x16x16xf32>, vector<1x3x16x8xf32> -> vector<1x3x16x32xf32>
    %313 = vector.extract_strided_slice %312 {offsets = [0, 0, 0, 0], sizes = [1, 3, 16, 16], strides = [1, 1, 1, 1]} : vector<1x3x16x32xf32> to vector<1x3x16x16xf32>
    %cst_90 = arith.constant 0.054488685 : f32
    %314 = vector.broadcast %cst_90 : f32 to vector<1x3x16x16xf32>
    %315 = arith.mulf %314, %313 : vector<1x3x16x16xf32>
    %316 = vector.extract_strided_slice %312 {offsets = [0, 0, 0, 4], sizes = [1, 3, 16, 16], strides = [1, 1, 1, 1]} : vector<1x3x16x32xf32> to vector<1x3x16x16xf32>
    %cst_91 = arith.constant 0.244201347 : f32
    %317 = vector.broadcast %cst_91 : f32 to vector<1x3x16x16xf32>
    %318 = arith.mulf %317, %316 : vector<1x3x16x16xf32>
    %319 = arith.addf %315, %318 : vector<1x3x16x16xf32>
    %320 = vector.extract_strided_slice %312 {offsets = [0, 0, 0, 8], sizes = [1, 3, 16, 16], strides = [1, 1, 1, 1]} : vector<1x3x16x32xf32> to vector<1x3x16x16xf32>
    %cst_92 = arith.constant 0.402619958 : f32
    %321 = vector.broadcast %cst_92 : f32 to vector<1x3x16x16xf32>
    %322 = arith.mulf %321, %320 : vector<1x3x16x16xf32>
    %323 = arith.addf %319, %322 : vector<1x3x16x16xf32>
    %324 = vector.extract_strided_slice %312 {offsets = [0, 0, 0, 12], sizes = [1, 3, 16, 16], strides = [1, 1, 1, 1]} : vector<1x3x16x32xf32> to vector<1x3x16x16xf32>
    %cst_93 = arith.constant 0.244201347 : f32
    %325 = vector.broadcast %cst_93 : f32 to vector<1x3x16x16xf32>
    %326 = arith.mulf %325, %324 : vector<1x3x16x16xf32>
    %327 = arith.addf %323, %326 : vector<1x3x16x16xf32>
    %328 = vector.extract_strided_slice %312 {offsets = [0, 0, 0, 16], sizes = [1, 3, 16, 16], strides = [1, 1, 1, 1]} : vector<1x3x16x32xf32> to vector<1x3x16x16xf32>
    %cst_94 = arith.constant 0.054488685 : f32
    %329 = vector.broadcast %cst_94 : f32 to vector<1x3x16x16xf32>
    %330 = arith.mulf %329, %328 : vector<1x3x16x16xf32>
    %331 = arith.addf %327, %330 : vector<1x3x16x16xf32>
    %cst_95 = arith.constant 0.000000e+00 : f32
    %332 = vector.broadcast %cst_95 : f32 to vector<1x3x8x16xf32>
    %333 = tpu.concatenate %332, %331, %332 in 2 : vector<1x3x8x16xf32>, vector<1x3x16x16xf32>, vector<1x3x8x16xf32> -> vector<1x3x32x16xf32>
    %334 = vector.extract_strided_slice %333 {offsets = [0, 0, 0, 0], sizes = [1, 3, 16, 16], strides = [1, 1, 1, 1]} : vector<1x3x32x16xf32> to vector<1x3x16x16xf32>
    %cst_96 = arith.constant 0.054488685 : f32
    %335 = vector.broadcast %cst_96 : f32 to vector<1x3x16x16xf32>
    %336 = arith.mulf %335, %334 : vector<1x3x16x16xf32>
    %337 = vector.extract_strided_slice %333 {offsets = [0, 0, 4, 0], sizes = [1, 3, 16, 16], strides = [1, 1, 1, 1]} : vector<1x3x32x16xf32> to vector<1x3x16x16xf32>
    %cst_97 = arith.constant 0.244201347 : f32
    %338 = vector.broadcast %cst_97 : f32 to vector<1x3x16x16xf32>
    %339 = arith.mulf %338, %337 : vector<1x3x16x16xf32>
    %340 = arith.addf %336, %339 : vector<1x3x16x16xf32>
    %341 = vector.extract_strided_slice %333 {offsets = [0, 0, 8, 0], sizes = [1, 3, 16, 16], strides = [1, 1, 1, 1]} : vector<1x3x32x16xf32> to vector<1x3x16x16xf32>
    %cst_98 = arith.constant 0.402619958 : f32
    %342 = vector.broadcast %cst_98 : f32 to vector<1x3x16x16xf32>
    %343 = arith.mulf %342, %341 : vector<1x3x16x16xf32>
    %344 = arith.addf %340, %343 : vector<1x3x16x16xf32>
    %345 = vector.extract_strided_slice %333 {offsets = [0, 0, 12, 0], sizes = [1, 3, 16, 16], strides = [1, 1, 1, 1]} : vector<1x3x32x16xf32> to vector<1x3x16x16xf32>
    %cst_99 = arith.constant 0.244201347 : f32
    %346 = vector.broadcast %cst_99 : f32 to vector<1x3x16x16xf32>
    %347 = arith.mulf %346, %345 : vector<1x3x16x16xf32>
    %348 = arith.addf %344, %347 : vector<1x3x16x16xf32>
    %349 = vector.extract_strided_slice %333 {offsets = [0, 0, 16, 0], sizes = [1, 3, 16, 16], strides = [1, 1, 1, 1]} : vector<1x3x32x16xf32> to vector<1x3x16x16xf32>
    %cst_100 = arith.constant 0.054488685 : f32
    %350 = vector.broadcast %cst_100 : f32 to vector<1x3x16x16xf32>
    %351 = arith.mulf %350, %349 : vector<1x3x16x16xf32>
    %352 = arith.addf %348, %351 : vector<1x3x16x16xf32>
    %c4_i32 = arith.constant 4 : i32
    %353 = vector.broadcast %c4_i32 : i32 to vector<1x3x16x16xi32>
    %354 = arith.andi %2, %353 : vector<1x3x16x16xi32>
    %c0_i32_101 = arith.constant 0 : i32
    %355 = vector.broadcast %c0_i32_101 : i32 to vector<1x3x16x16xi32>
    %356 = arith.cmpi eq, %354, %355 : vector<1x3x16x16xi32>
    %c4_i32_102 = arith.constant 4 : i32
    %357 = vector.broadcast %c4_i32_102 : i32 to vector<1x3x16x16xi32>
    %358 = arith.andi %3, %357 : vector<1x3x16x16xi32>
    %c0_i32_103 = arith.constant 0 : i32
    %359 = vector.broadcast %c0_i32_103 : i32 to vector<1x3x16x16xi32>
    %360 = arith.cmpi eq, %358, %359 : vector<1x3x16x16xi32>
    %361 = vector.extract_strided_slice %310 {offsets = [0, 0, 0, 0], sizes = [1, 3, 16, 4], strides = [1, 1, 1, 1]} : vector<1x3x16x16xf32> to vector<1x3x16x4xf32>
    %362 = vector.extract_strided_slice %310 {offsets = [0, 0, 0, 0], sizes = [1, 3, 16, 12], strides = [1, 1, 1, 1]} : vector<1x3x16x16xf32> to vector<1x3x16x12xf32>
    %363 = tpu.concatenate %361, %362 in 3 : vector<1x3x16x4xf32>, vector<1x3x16x12xf32> -> vector<1x3x16x16xf32>
    %364 = arith.select %360, %310, %363 : vector<1x3x16x16xi1>, vector<1x3x16x16xf32>
    %365 = vector.extract_strided_slice %364 {offsets = [0, 0, 0, 0], sizes = [1, 3, 4, 16], strides = [1, 1, 1, 1]} : vector<1x3x16x16xf32> to vector<1x3x4x16xf32>
    %366 = vector.extract_strided_slice %364 {offsets = [0, 0, 0, 0], sizes = [1, 3, 12, 16], strides = [1, 1, 1, 1]} : vector<1x3x16x16xf32> to vector<1x3x12x16xf32>
    %367 = tpu.concatenate %365, %366 in 2 : vector<1x3x4x16xf32>, vector<1x3x12x16xf32> -> vector<1x3x16x16xf32>
    %368 = arith.select %356, %364, %367 : vector<1x3x16x16xi1>, vector<1x3x16x16xf32>
    %369 = arith.subf %173, %368 : vector<1x3x16x16xf32>
    %370 = math.absf %369 : vector<1x3x16x16xf32>
    %cst_104 = arith.constant dense<0.000000e+00> : vector<1x16x16xf32>
    %371 = vector.multi_reduction <add>, %370, %cst_104 [1] : vector<1x3x16x16xf32> to vector<1x16x16xf32>
    %cst_105 = arith.constant 3.000000e+00 : f32
    %372 = vector.broadcast %cst_105 : f32 to vector<1x16x16xf32>
    %373 = arith.divf %371, %372 : vector<1x16x16xf32>
    %374 = vector.extract_strided_slice %352 {offsets = [0, 0, 0, 0], sizes = [1, 3, 16, 4], strides = [1, 1, 1, 1]} : vector<1x3x16x16xf32> to vector<1x3x16x4xf32>
    %375 = vector.extract_strided_slice %352 {offsets = [0, 0, 0, 0], sizes = [1, 3, 16, 12], strides = [1, 1, 1, 1]} : vector<1x3x16x16xf32> to vector<1x3x16x12xf32>
    %376 = tpu.concatenate %374, %375 in 3 : vector<1x3x16x4xf32>, vector<1x3x16x12xf32> -> vector<1x3x16x16xf32>
    %377 = arith.select %360, %352, %376 : vector<1x3x16x16xi1>, vector<1x3x16x16xf32>
    %378 = vector.extract_strided_slice %377 {offsets = [0, 0, 0, 0], sizes = [1, 3, 4, 16], strides = [1, 1, 1, 1]} : vector<1x3x16x16xf32> to vector<1x3x4x16xf32>
    %379 = vector.extract_strided_slice %377 {offsets = [0, 0, 0, 0], sizes = [1, 3, 12, 16], strides = [1, 1, 1, 1]} : vector<1x3x16x16xf32> to vector<1x3x12x16xf32>
    %380 = tpu.concatenate %378, %379 in 2 : vector<1x3x4x16xf32>, vector<1x3x12x16xf32> -> vector<1x3x16x16xf32>
    %381 = arith.select %356, %377, %380 : vector<1x3x16x16xi1>, vector<1x3x16x16xf32>
    %382 = arith.subf %215, %381 : vector<1x3x16x16xf32>
    %383 = math.absf %382 : vector<1x3x16x16xf32>
    %cst_106 = arith.constant dense<0.000000e+00> : vector<1x16x16xf32>
    %384 = vector.multi_reduction <add>, %383, %cst_106 [1] : vector<1x3x16x16xf32> to vector<1x16x16xf32>
    %cst_107 = arith.constant 3.000000e+00 : f32
    %385 = vector.broadcast %cst_107 : f32 to vector<1x16x16xf32>
    %386 = arith.divf %384, %385 : vector<1x16x16xf32>
    %387 = arith.subf %373, %386 : vector<1x16x16xf32>
    %388 = math.absf %387 : vector<1x16x16xf32>
    %c3_i32 = arith.constant 3 : i32
    %389 = vector.broadcast %c3_i32 : i32 to vector<1x16x16xi32>
    %390 = arith.andi %4, %389 : vector<1x16x16xi32>
    %c0_i32_108 = arith.constant 0 : i32
    %391 = vector.broadcast %c0_i32_108 : i32 to vector<1x16x16xi32>
    %392 = arith.cmpi eq, %390, %391 : vector<1x16x16xi32>
    %c3_i32_109 = arith.constant 3 : i32
    %393 = vector.broadcast %c3_i32_109 : i32 to vector<1x16x16xi32>
    %394 = arith.andi %5, %393 : vector<1x16x16xi32>
    %c0_i32_110 = arith.constant 0 : i32
    %395 = vector.broadcast %c0_i32_110 : i32 to vector<1x16x16xi32>
    %396 = arith.cmpi eq, %394, %395 : vector<1x16x16xi32>
    %397 = arith.andi %392, %396 : vector<1x16x16xi1>
    %cst_111 = arith.constant 0.000000e+00 : f32
    %398 = vector.broadcast %cst_111 : f32 to vector<1x16x16xf32>
    %399 = arith.select %397, %388, %398 : vector<1x16x16xi1>, vector<1x16x16xf32>
    %400 = vector.shape_cast %399 : vector<1x16x16xf32> to vector<1x1x16x16xf32>
    %cst_112 = arith.constant dense<0.000000e+00> : vector<1xf32>
    %401 = vector.multi_reduction <add>, %400, %cst_112 [1, 2, 3] : vector<1x1x16x16xf32> to vector<1xf32>
    %402 = vector.shape_cast %401 : vector<1xf32> to vector<1x1x1x1xf32>
    %403 = vector.extract %402[0, 0, 0, 0] : f32 from vector<1x1x1x1xf32>
    %cst_113 = arith.constant 1.600000e+01 : f32
    %404 = arith.divf %403, %cst_113 : f32
    %405 = arith.addf %268, %404 : f32
    %c7_i32 = arith.constant 7 : i32
    %406 = vector.broadcast %c7_i32 : i32 to vector<1x3x16x16xi32>
    %407 = arith.andi %2, %406 : vector<1x3x16x16xi32>
    %c0_i32_114 = arith.constant 0 : i32
    %408 = vector.broadcast %c0_i32_114 : i32 to vector<1x3x16x16xi32>
    %409 = arith.cmpi eq, %407, %408 : vector<1x3x16x16xi32>
    %c7_i32_115 = arith.constant 7 : i32
    %410 = vector.broadcast %c7_i32_115 : i32 to vector<1x3x16x16xi32>
    %411 = arith.andi %3, %410 : vector<1x3x16x16xi32>
    %c0_i32_116 = arith.constant 0 : i32
    %412 = vector.broadcast %c0_i32_116 : i32 to vector<1x3x16x16xi32>
    %413 = arith.cmpi eq, %411, %412 : vector<1x3x16x16xi32>
    %414 = arith.andi %409, %413 : vector<1x3x16x16xi1>
    %415 = arith.subf %310, %352 : vector<1x3x16x16xf32>
    %416 = math.absf %415 : vector<1x3x16x16xf32>
    %cst_117 = arith.constant 0.000000e+00 : f32
    %417 = vector.broadcast %cst_117 : f32 to vector<1x3x16x16xf32>
    %418 = arith.select %414, %416, %417 : vector<1x3x16x16xi1>, vector<1x3x16x16xf32>
    %419 = vector.shape_cast %418 : vector<1x3x16x16xf32> to vector<1x1x3x16x16xf32>
    %cst_118 = arith.constant dense<0.000000e+00> : vector<1xf32>
    %420 = vector.multi_reduction <add>, %419, %cst_118 [1, 2, 3, 4] : vector<1x1x3x16x16xf32> to vector<1xf32>
    %421 = vector.shape_cast %420 : vector<1xf32> to vector<1x1x1x1x1xf32>
    %422 = vector.extract %421[0, 0, 0, 0, 0] : f32 from vector<1x1x1x1x1xf32>
    %cst_119 = arith.constant 1.200000e+01 : f32
    %423 = arith.divf %422, %cst_119 : f32
    %424 = arith.addf %405, %423 : f32
    %425 = vector.broadcast %424 : f32 to vector<1x8x128xf32>
    %c0_120 = arith.constant 0 : index
    %c0_121 = arith.constant 0 : index
    %c0_122 = arith.constant 0 : index
    %426 = vector.load %arg3[%c0_120, %c0_121, %c0_122] : memref<1x8x128xf32, #tpu.memory_space<vmem>>, vector<1x8x128xf32>
    tpu.vector_store %arg3[%c0_120, %c0_121, %c0_122], %425 {strides = array<i32>} : memref<1x8x128xf32, #tpu.memory_space<vmem>>, vector<1x8x128xf32>,
    return
  }
  func.func @transform_0(%arg0: i32) -> (i32, i32, i32, i32) {
    %c0_i32 = arith.constant 0 : i32
    %c0_i32_0 = arith.constant 0 : i32
    %c0_i32_1 = arith.constant 0 : i32
    %c0_i32_2 = arith.constant 0 : i32
    return %arg0, %c0_i32, %c0_i32_0, %c0_i32_1 : i32, i32, i32, i32
  }
  func.func @transform_1(%arg0: i32) -> (i32, i32, i32, i32) {
    %c0_i32 = arith.constant 0 : i32
    %c0_i32_0 = arith.constant 0 : i32
    %c0_i32_1 = arith.constant 0 : i32
    %c0_i32_2 = arith.constant 0 : i32
    return %arg0, %c0_i32, %c0_i32_0, %c0_i32_1 : i32, i32, i32, i32
  }
  func.func @transform_2(%arg0: i32) -> (i32, i32, i32) {
    %c0_i32 = arith.constant 0 : i32
    %c0_i32_0 = arith.constant 0 : i32
    %c0_i32_1 = arith.constant 0 : i32
    return %arg0, %c0_i32, %c0_i32_0 : i32, i32, i32
  }
}

</mosaic_0001>

<llo_original>
// kernel: laplacian_pyramid_loss.1
$region0: #{laplacian_pyramid_loss.1}
  #allocation0 [shape = 'u32[]', space=smem, size = 0x4, offset = 0x4, fixed_abs, tag = 'smem constant byte address 0x4 - core index']
  #allocation1 [shape = 'u32[144,128]{1,0:T(1,128)}', space=vmem, size = 0x12000, scoped, tag = 'internal scratch']
  %s0 = inlined_call_operand.hbm [shape: f32[2,3,16,16], index: 0, kind: input, shape index: {}]
  %s1 = inlined_call_operand.hbm [shape: f32[2,3,16,16], index: 1, kind: input, shape index: {}]
  %s2 = inlined_call_operand.vmem [shape: f32[2,8,128], index: 2, kind: output, shape index: {}]
  %s3 = sld [smem:[#allocation0]]
  $region49: #{laplacian_pyramid_loss.1} parent=0
    _
  %s5 = ssub.s32 1, %s3
  %s6 = scalar_select 0, %s5, %s3
  $region1: #{laplacian_pyramid_loss.1} parent=0
    #allocation2 [shape = 'u8[49152]{0}', space=vmem, size = 0xc000, scoped, tag = 'input window, operand 0']
    #allocation3 [shape = 's32[2]{0}', space=sflag, size = 0x8, scoped, tag = 'scoped memory for laplacian_pyramid_loss.1']
    #allocation4 [shape = 'u8[49152]{0}', space=vmem, size = 0xc000, scoped, tag = 'input window, operand 1']
    #allocation5 [shape = 's32[2]{0}', space=sflag, size = 0x8, scoped, tag = 'scoped memory for laplacian_pyramid_loss.1']
    %7 = vsyncpa [#allocation3], 0
    %s8 = scalar_lea.sflag [#allocation3], 1
    %9 = vsyncpa %s8, 0
    %10 = vsyncpa [#allocation5], 0
    %s11 = scalar_lea.sflag [#allocation5], 1
    %12 = vsyncpa %s11, 0
    loop: start=0, step=1, limit=4
    $region2: #{laplacian_pyramid_loss.1} parent=1 // loop_pre_header
      _
    $region3: #{laplacian_pyramid_loss.1} parent=1 // loop_header
      %s14 = sphi 0, %s18
      %p15 = scmp.ge.s32.totalorder %s14, 4
      %s24 = sphi 0, %s26
      %s27 = sphi 0, %s24
      %s28 = sphi 0, %s27
      %s44 = sphi 0, %s28
      %s50 = sphi 0, %s52
      %s53 = sphi 0, %s50
      %s54 = sphi 0, %s53
      %s70 = sphi 0, %s54
      %s76 = sphi 0, %s78
      %s79 = sphi 0, %s76
      %s80 = sphi 0, %s79
      %s96 = sphi 0, %s80
    $region4: #{laplacian_pyramid_loss.1} parent=1 // loop_header_branch
      %17 = sbr.rel (%p15) target = $region8
    $region5: #{laplacian_pyramid_loss.1} parent=1 // loop_body
      %s19 = ssub.s32 %s14, 1
      %s20 = ssub.s32 %s14, 2
      %s21 = sadd.s32 %s14, 1
      %s22 = ssub.s32 %s14, %s21
      %p23 = scmp.eq.s32.totalorder %s22, 0
      %s25 = sadd.s32 %s24, 1
      %s26 = scalar_select %p23, %s24, %s25
      %p29 = pneg %p23
      %p30 = scmp.eq.s32.totalorder %s14, 1
      %p31 = por %p29, %p30
      %p32 = scmp.ne.s32.totalorder %s24, %s27
      %p33 = scmp.eq.s32.totalorder %s14, 0
      %p34 = por %p32, %p33
      %p35 = scmp.ne.s32.totalorder %s24, %s27
      %p36 = scmp.eq.s32.totalorder %s19, 1
      %p37 = por %p35, %p36
      %p38 = scmp.ne.s32.totalorder %s27, %s28
      %p39 = scmp.eq.s32.totalorder %s19, 0
      %p40 = por %p38, %p39
      %p41 = scmp.ne.s32.totalorder %s27, %s28
      %p42 = scmp.eq.s32.totalorder %s20, 1
      %p43 = por %p41, %p42
      %p45 = scmp.ne.s32.totalorder %s28, %s44
      %p46 = scmp.eq.s32.totalorder %s20, 0
      %p47 = por %p45, %p46
      %s48 = ssub.s32 %s14, %s21
      %p49 = scmp.eq.s32.totalorder %s48, 0
      %s51 = sadd.s32 %s50, 1
      %s52 = scalar_select %p49, %s50, %s51
      %p55 = pneg %p49
      %p56 = scmp.eq.s32.totalorder %s14, 1
      %p57 = por %p55, %p56
      %p58 = scmp.ne.s32.totalorder %s50, %s53
      %p59 = scmp.eq.s32.totalorder %s14, 0
      %p60 = por %p58, %p59
      %p61 = scmp.ne.s32.totalorder %s50, %s53
      %p62 = scmp.eq.s32.totalorder %s19, 1
      %p63 = por %p61, %p62
      %p64 = scmp.ne.s32.totalorder %s53, %s54
      %p65 = scmp.eq.s32.totalorder %s19, 0
      %p66 = por %p64, %p65
      %p67 = scmp.ne.s32.totalorder %s53, %s54
      %p68 = scmp.eq.s32.totalorder %s20, 1
      %p69 = por %p67, %p68
      %p71 = scmp.ne.s32.totalorder %s54, %s70
      %p72 = scmp.eq.s32.totalorder %s20, 0
      %p73 = por %p71, %p72
      %s74 = ssub.s32 %s14, %s21
      %p75 = scmp.eq.s32.totalorder %s74, 0
      %s77 = sadd.s32 %s76, 1
      %s78 = scalar_select %p75, %s76, %s77
      %p81 = pneg %p75
      %p82 = scmp.eq.s32.totalorder %s14, 1
      %p83 = por %p81, %p82
      %p84 = scmp.ne.s32.totalorder %s76, %s79
      %p85 = scmp.eq.s32.totalorder %s14, 0
      %p86 = por %p84, %p85
      %p87 = scmp.ne.s32.totalorder %s76, %s79
      %p88 = scmp.eq.s32.totalorder %s19, 1
      %p89 = por %p87, %p88
      %p90 = scmp.ne.s32.totalorder %s79, %s80
      %p91 = scmp.eq.s32.totalorder %s19, 0
      %p92 = por %p90, %p91
      %p93 = scmp.ne.s32.totalorder %s79, %s80
      %p94 = scmp.eq.s32.totalorder %s20, 1
      %p95 = por %p93, %p94
      %p97 = scmp.ne.s32.totalorder %s80, %s96
      %p98 = scmp.eq.s32.totalorder %s20, 0
      %p99 = por %p97, %p98
      %p100 = scmp.le.s32.totalorder 1, %s14
      %p101 = scmp.lt.s32.totalorder %s14, 3
      %p102 = pnand %p100, %p101
      %p103 = pneg %p102
      // Predicated region
      $region9: #{laplacian_pyramid_loss.1} parent=5 // pred_check
        _
      $region10: #{laplacian_pyramid_loss.1} parent=5 // pred_check_branch
        %105 = sbr.rel (%p102) target = $region12
      $region11: #{laplacian_pyramid_loss.1} parent=5 // pred_region
        %s106 = ssub.s32 %s14, 1
      $region12: #{laplacian_pyramid_loss.1} parent=5 // pred_fallthru
        _
      %p107 = scmp.lt.s32.totalorder %s14, 2
      // Predicated region
      $region13: #{laplacian_pyramid_loss.1} parent=5 // pred_check
        %p108 = pneg %p107
      $region14: #{laplacian_pyramid_loss.1} parent=5 // pred_check_branch
        %110 = sbr.rel (%p108) target = $region16
      $region15: #{laplacian_pyramid_loss.1} parent=5 // pred_region
        // Predicated region
        $region17: #{laplacian_pyramid_loss.1} parent=15 // pred_check
          %p111 = pneg %p34
        $region18: #{laplacian_pyramid_loss.1} parent=15 // pred_check_branch
          %113 = sbr.rel (%p111) target = $region20
        $region19: #{laplacian_pyramid_loss.1} parent=15 // pred_region
          %s114 = sand.u32 %s24, 1
          %s115 = scalar_lea.sflag [#allocation3], %s114
          %s116 = sand.u32 %s24, 1
          %s117 = smul.addr %s116, 48
          %s118 = scalar_lea.vmem [#allocation2], %s117
          %s120 = ssub.s32 768, 768
          %121 = vsyncadd %s115, %s120
          %s122 = smul.addr %s14, 6
          %s123 = smul.addr %s122, 128
          %s124 = scalar_lea.hbm %s0, %s123
          %s125 = sshll.u32 %s118, 4
          %s126 = int_to_ptr.vmem [resolvable:$true] %s125
          %131 = dma.hbm_to_vmem [thread:$0]  %s124, 768, %s126, %s115, 128, 128, 8
        $region20: #{laplacian_pyramid_loss.1} parent=15 // pred_fallthru
          _
        // Predicated region
        $region21: #{laplacian_pyramid_loss.1} parent=15 // pred_check
          %p132 = pneg %p60
        $region22: #{laplacian_pyramid_loss.1} parent=15 // pred_check_branch
          %134 = sbr.rel (%p132) target = $region24
        $region23: #{laplacian_pyramid_loss.1} parent=15 // pred_region
          %s135 = sand.u32 %s50, 1
          %s136 = scalar_lea.sflag [#allocation5], %s135
          %s137 = sand.u32 %s50, 1
          %s138 = smul.addr %s137, 48
          %s139 = scalar_lea.vmem [#allocation4], %s138
          %s141 = ssub.s32 768, 768
          %142 = vsyncadd %s136, %s141
          %s143 = smul.addr %s14, 6
          %s144 = smul.addr %s143, 128
          %s145 = scalar_lea.hbm %s1, %s144
          %s146 = sshll.u32 %s139, 4
          %s147 = int_to_ptr.vmem [resolvable:$true] %s146
          %152 = dma.hbm_to_vmem [thread:$0]  %s145, 768, %s147, %s136, 128, 128, 8
        $region24: #{laplacian_pyramid_loss.1} parent=15 // pred_fallthru
          _
      $region16: #{laplacian_pyramid_loss.1} parent=5 // pred_fallthru
        _
      %p153 = scmp.le.s32.totalorder 1, %s14
      %p154 = scmp.lt.s32.totalorder %s14, 3
      %p155 = pnand %p153, %p154
      %p156 = pneg %p155
      // Predicated region
      $region25: #{laplacian_pyramid_loss.1} parent=5 // pred_check
        _
      $region26: #{laplacian_pyramid_loss.1} parent=5 // pred_check_branch
        %158 = sbr.rel (%p155) target = $region28
      $region27: #{laplacian_pyramid_loss.1} parent=5 // pred_region
        %s159 = ssub.s32 %s14, 1
        %s160 = sand.u32 %s27, 1
        %s161 = scalar_lea.sflag [#allocation3], %s160
        %s162 = sand.u32 %s27, 1
        %s163 = smul.addr %s162, 48
        %s164 = scalar_lea.vmem [#allocation2], %s163
        // Predicated region
        $region29: #{laplacian_pyramid_loss.1} parent=27 // pred_check
          %p165 = pneg %p40
        $region30: #{laplacian_pyramid_loss.1} parent=27 // pred_check_branch
          %167 = sbr.rel (%p165) target = $region32
        $region31: #{laplacian_pyramid_loss.1} parent=27 // pred_region
          %168 = dma.done %s161, 768
        $region32: #{laplacian_pyramid_loss.1} parent=27 // pred_fallthru
          _
        %s169 = sand.u32 %s53, 1
        %s170 = scalar_lea.sflag [#allocation5], %s169
        %s171 = sand.u32 %s53, 1
        %s172 = smul.addr %s171, 48
        %s173 = scalar_lea.vmem [#allocation4], %s172
        // Predicated region
        $region33: #{laplacian_pyramid_loss.1} parent=27 // pred_check
          %p174 = pneg %p66
        $region34: #{laplacian_pyramid_loss.1} parent=27 // pred_check_branch
          %176 = sbr.rel (%p174) target = $region36
        $region35: #{laplacian_pyramid_loss.1} parent=27 // pred_region
          %177 = dma.done %s170, 768
        $region36: #{laplacian_pyramid_loss.1} parent=27 // pred_fallthru
          _
        %s178 = sand.u32 %s27, 1
        %s179 = scalar_lea.sflag [#allocation3], %s178
        %s180 = sand.u32 %s27, 1
        %s181 = smul.addr %s180, 48
        %s182 = scalar_lea.vmem [#allocation2], %s181
        %p183 = pneg %p40
        %p184 = pneg %p37
        %s185 = sand.u32 %s53, 1
        %s186 = scalar_lea.sflag [#allocation5], %s185
        %s187 = sand.u32 %s53, 1
        %s188 = smul.addr %s187, 48
        %s189 = scalar_lea.vmem [#allocation4], %s188
        %p190 = pneg %p66
        %p191 = pneg %p63
        %p192 = pneg %p92
        %p193 = pneg %p89
        %p194 = scmp.lt.s32.totalorder %s19, 1
        %s195 = scalar_select %p194, %s19, 1
        %s196 = smul.addr %s195, 8
        %s197 = scalar_lea.vmem %s2, %s196
        %p198 = scmp.lt.s32.totalorder %s19, 1
        %s199 = scalar_select %p198, %s19, 1
        %s200 = smul.addr %s199, 8
        %s201 = scalar_lea.vmem %s2, %s200
        %v202 = vld [vmem:[%s164] sm:$0xff]
        %v203 = vld [vmem:[%s164 + $0x8] sm:$0xff]
        %v204 = vld [vmem:[%s164 + $0x10] sm:$0xff]
        %v205 = vld [vmem:[%s164 + $0x18] sm:$0xff]
        %v206 = vld [vmem:[%s164 + $0x20] sm:$0xff]
        %v207 = vld [vmem:[%s164 + $0x28] sm:$0xff]
        %v208 = vld [vmem:[%s173] sm:$0xff]
        %v209 = vld [vmem:[%s173 + $0x8] sm:$0xff]
        %v210 = vld [vmem:[%s173 + $0x10] sm:$0xff]
        %v211 = vld [vmem:[%s173 + $0x18] sm:$0xff]
        %v212 = vld [vmem:[%s173 + $0x20] sm:$0xff]
        %v213 = vld [vmem:[%s173 + $0x28] sm:$0xff]
        %v214 = vlaneseq
        %v215 = vshrl.u32 %v214, 7
        %v216 = vadd.s32 %v215, 8
        %v217 = vlaneseq
        %v218 = vand.u32 %v217, 127
        %225 = vrot.lane.b32.xlu0 %v202, 2
        %v226 = vpop.permute.xlu0 %225
        %227 = vrot.lane.b32.xlu0 %v203, 2
        %v228 = vpop.permute.xlu0 %227
        %229 = vrot.lane.b32.xlu0 %v204, 2
        %v230 = vpop.permute.xlu0 %229
        %231 = vrot.lane.b32.xlu0 %v205, 2
        %v232 = vpop.permute.xlu0 %231
        %233 = vrot.lane.b32.xlu0 %v206, 2
        %v234 = vpop.permute.xlu0 %233
        %235 = vrot.lane.b32.xlu0 %v207, 2
        %v236 = vpop.permute.xlu0 %235
        %vm243 = vcmask 15360
        %v244 = vsel %vm243, 0.0, %v226
        %v245 = vsel %vm243, 0.0, %v228
        %v246 = vsel %vm243, 0.0, %v230
        %v247 = vsel %vm243, 0.0, %v232
        %v248 = vsel %vm243, 0.0, %v234
        %v249 = vsel %vm243, 0.0, %v236
        %vm250 = vcmask 146432
        %v251 = vsel %vm250, %v244, 0.0
        %v252 = vsel %vm250, %v245, 0.0
        %v253 = vsel %vm250, %v246, 0.0
        %v254 = vsel %vm250, %v247, 0.0
        %v255 = vsel %vm250, %v248, 0.0
        %v256 = vsel %vm250, %v249, 0.0
        %v257 = vmul.f32 %v251, 0.054488685
        %v258 = vmul.f32 %v252, 0.054488685
        %v259 = vmul.f32 %v253, 0.054488685
        %v260 = vmul.f32 %v254, 0.054488685
        %v261 = vmul.f32 %v255, 0.054488685
        %v262 = vmul.f32 %v256, 0.054488685
        %v263 = vmul.f32 %v251, 0.24420135
        %v264 = vmul.f32 %v252, 0.24420135
        %v265 = vmul.f32 %v253, 0.24420135
        %v266 = vmul.f32 %v254, 0.24420135
        %v267 = vmul.f32 %v255, 0.24420135
        %v268 = vmul.f32 %v256, 0.24420135
        %275 = vrot.lane.b32.xlu0 %v263, 127
        %v276 = vpop.permute.xlu0 %275
        %277 = vrot.lane.b32.xlu0 %v264, 127
        %v278 = vpop.permute.xlu0 %277
        %279 = vrot.lane.b32.xlu0 %v265, 127
        %v280 = vpop.permute.xlu0 %279
        %281 = vrot.lane.b32.xlu0 %v266, 127
        %v282 = vpop.permute.xlu0 %281
        %283 = vrot.lane.b32.xlu0 %v267, 127
        %v284 = vpop.permute.xlu0 %283
        %285 = vrot.lane.b32.xlu0 %v268, 127
        %v286 = vpop.permute.xlu0 %285
        %v293 = vadd.f32 %v257, %v276
        %v294 = vadd.f32 %v258, %v278
        %v295 = vadd.f32 %v259, %v280
        %v296 = vadd.f32 %v260, %v282
        %v297 = vadd.f32 %v261, %v284
        %v298 = vadd.f32 %v262, %v286
        %v299 = vmul.f32 %v251, 0.40261996
        %v300 = vmul.f32 %v252, 0.40261996
        %v301 = vmul.f32 %v253, 0.40261996
        %v302 = vmul.f32 %v254, 0.40261996
        %v303 = vmul.f32 %v255, 0.40261996
        %v304 = vmul.f32 %v256, 0.40261996
        %311 = vrot.lane.b32.xlu0 %v299, 126
        %v312 = vpop.permute.xlu0 %311
        %313 = vrot.lane.b32.xlu0 %v300, 126
        %v314 = vpop.permute.xlu0 %313
        %315 = vrot.lane.b32.xlu0 %v301, 126
        %v316 = vpop.permute.xlu0 %315
        %317 = vrot.lane.b32.xlu0 %v302, 126
        %v318 = vpop.permute.xlu0 %317
        %319 = vrot.lane.b32.xlu0 %v303, 126
        %v320 = vpop.permute.xlu0 %319
        %321 = vrot.lane.b32.xlu0 %v304, 126
        %v322 = vpop.permute.xlu0 %321
        %v329 = vadd.f32 %v293, %v312
        %v330 = vadd.f32 %v294, %v314
        %v331 = vadd.f32 %v295, %v316
        %v332 = vadd.f32 %v296, %v318
        %v333 = vadd.f32 %v297, %v320
        %v334 = vadd.f32 %v298, %v322
        %335 = vrot.lane.b32.xlu0 %v263, 125
        %v336 = vpop.permute.xlu0 %335
        %337 = vrot.lane.b32.xlu0 %v264, 125
        %v338 = vpop.permute.xlu0 %337
        %339 = vrot.lane.b32.xlu0 %v265, 125
        %v340 = vpop.permute.xlu0 %339
        %341 = vrot.lane.b32.xlu0 %v266, 125
        %v342 = vpop.permute.xlu0 %341
        %343 = vrot.lane.b32.xlu0 %v267, 125
        %v344 = vpop.permute.xlu0 %343
        %345 = vrot.lane.b32.xlu0 %v268, 125
        %v346 = vpop.permute.xlu0 %345
        %v353 = vadd.f32 %v329, %v336
        %v354 = vadd.f32 %v330, %v338
        %v355 = vadd.f32 %v331, %v340
        %v356 = vadd.f32 %v332, %v342
        %v357 = vadd.f32 %v333, %v344
        %v358 = vadd.f32 %v334, %v346
        %365 = vrot.lane.b32.xlu0 %v257, 124
        %v366 = vpop.permute.xlu0 %365
        %367 = vrot.lane.b32.xlu0 %v258, 124
        %v368 = vpop.permute.xlu0 %367
        %369 = vrot.lane.b32.xlu0 %v259, 124
        %v370 = vpop.permute.xlu0 %369
        %371 = vrot.lane.b32.xlu0 %v260, 124
        %v372 = vpop.permute.xlu0 %371
        %373 = vrot.lane.b32.xlu0 %v261, 124
        %v374 = vpop.permute.xlu0 %373
        %375 = vrot.lane.b32.xlu0 %v262, 124
        %v376 = vpop.permute.xlu0 %375
        %v383 = vadd.f32 %v353, %v366
        %v384 = vadd.f32 %v354, %v368
        %v385 = vadd.f32 %v355, %v370
        %v386 = vadd.f32 %v356, %v372
        %v387 = vadd.f32 %v357, %v374
        %v388 = vadd.f32 %v358, %v376
        %vm395 = vcmask 1041408
        %v396 = vrot.slane %v383, 6
        %v397 = vrot.slane %v384, 6
        %v398 = vsel %vm395, %v396, %v397
        %v399 = vrot.slane %v385, 6
        %v400 = vrot.slane %v386, 6
        %v401 = vsel %vm395, %v399, %v400
        %v402 = vrot.slane %v387, 6
        %v403 = vrot.slane %v388, 6
        %v404 = vsel %vm395, %v402, %v403
        %v414 = vsel %vm395, 0.0, %v396
        %v415 = vsel %vm395, 0.0, %v399
        %v416 = vsel %vm395, 0.0, %v402
        %v417 = vsel %vm395, %v397, 0.0
        %v418 = vsel %vm395, %v400, 0.0
        %v419 = vsel %vm395, %v403, 0.0
        %v420 = vmul.f32 %v414, 0.054488685
        %v421 = vmul.f32 %v398, 0.054488685
        %v422 = vmul.f32 %v415, 0.054488685
        %v423 = vmul.f32 %v401, 0.054488685
        %v424 = vmul.f32 %v416, 0.054488685
        %v425 = vmul.f32 %v404, 0.054488685
        %v426 = vmul.f32 %v414, 0.24420135
        %v427 = vmul.f32 %v398, 0.24420135
        %v428 = vmul.f32 %v417, 0.24420135
        %v429 = vmul.f32 %v415, 0.24420135
        %v430 = vmul.f32 %v401, 0.24420135
        %v431 = vmul.f32 %v418, 0.24420135
        %v432 = vmul.f32 %v416, 0.24420135
        %v433 = vmul.f32 %v404, 0.24420135
        %v434 = vmul.f32 %v419, 0.24420135
        %vm444 = vcmask 1046528
        %v445 = vrot.slane %v426, 1
        %v446 = vrot.slane %v427, 1
        %v447 = vsel %vm444, %v445, %v446
        %v448 = vrot.slane %v428, 1
        %v449 = vsel %vm444, %v446, %v448
        %v450 = vrot.slane %v429, 1
        %v451 = vrot.slane %v430, 1
        %v452 = vsel %vm444, %v450, %v451
        %v453 = vrot.slane %v431, 1
        %v454 = vsel %vm444, %v451, %v453
        %v455 = vrot.slane %v432, 1
        %v456 = vrot.slane %v433, 1
        %v457 = vsel %vm444, %v455, %v456
        %v458 = vrot.slane %v434, 1
        %v459 = vsel %vm444, %v456, %v458
        %v466 = vadd.f32 %v420, %v447
        %v467 = vadd.f32 %v421, %v449
        %v468 = vadd.f32 %v422, %v452
        %v469 = vadd.f32 %v423, %v454
        %v470 = vadd.f32 %v424, %v457
        %v471 = vadd.f32 %v425, %v459
        %v472 = vmul.f32 %v414, 0.40261996
        %v473 = vmul.f32 %v398, 0.40261996
        %v474 = vmul.f32 %v417, 0.40261996
        %v475 = vmul.f32 %v415, 0.40261996
        %v476 = vmul.f32 %v401, 0.40261996
        %v477 = vmul.f32 %v418, 0.40261996
        %v478 = vmul.f32 %v416, 0.40261996
        %v479 = vmul.f32 %v404, 0.40261996
        %v480 = vmul.f32 %v419, 0.40261996
        %vm490 = vcmask 1045504
        %v491 = vrot.slane %v472, 2
        %v492 = vrot.slane %v473, 2
        %v493 = vsel %vm490, %v491, %v492
        %v494 = vrot.slane %v474, 2
        %v495 = vsel %vm490, %v492, %v494
        %v496 = vrot.slane %v475, 2
        %v497 = vrot.slane %v476, 2
        %v498 = vsel %vm490, %v496, %v497
        %v499 = vrot.slane %v477, 2
        %v500 = vsel %vm490, %v497, %v499
        %v501 = vrot.slane %v478, 2
        %v502 = vrot.slane %v479, 2
        %v503 = vsel %vm490, %v501, %v502
        %v504 = vrot.slane %v480, 2
        %v505 = vsel %vm490, %v502, %v504
        %v512 = vadd.f32 %v466, %v493
        %v513 = vadd.f32 %v467, %v495
        %v514 = vadd.f32 %v468, %v498
        %v515 = vadd.f32 %v469, %v500
        %v516 = vadd.f32 %v470, %v503
        %v517 = vadd.f32 %v471, %v505
        %vm518 = vcmask 1044480
        %v519 = vrot.slane %v426, 3
        %v520 = vrot.slane %v427, 3
        %v521 = vsel %vm518, %v519, %v520
        %v522 = vrot.slane %v428, 3
        %v523 = vsel %vm518, %v520, %v522
        %v524 = vrot.slane %v429, 3
        %v525 = vrot.slane %v430, 3
        %v526 = vsel %vm518, %v524, %v525
        %v527 = vrot.slane %v431, 3
        %v528 = vsel %vm518, %v525, %v527
        %v529 = vrot.slane %v432, 3
        %v530 = vrot.slane %v433, 3
        %v531 = vsel %vm518, %v529, %v530
        %v532 = vrot.slane %v434, 3
        %v533 = vsel %vm518, %v530, %v532
        %v540 = vadd.f32 %v512, %v521
        %v541 = vadd.f32 %v513, %v523
        %v542 = vadd.f32 %v514, %v526
        %v543 = vadd.f32 %v515, %v528
        %v544 = vadd.f32 %v516, %v531
        %v545 = vadd.f32 %v517, %v533
        %v546 = vmul.f32 %v417, 0.054488685
        %v547 = vmul.f32 %v418, 0.054488685
        %v548 = vmul.f32 %v419, 0.054488685
        %vm558 = vcmask 1043456
        %v559 = vrot.slane %v420, 4
        %v560 = vrot.slane %v421, 4
        %v561 = vsel %vm558, %v559, %v560
        %v562 = vrot.slane %v546, 4
        %v563 = vsel %vm558, %v560, %v562
        %v564 = vrot.slane %v422, 4
        %v565 = vrot.slane %v423, 4
        %v566 = vsel %vm558, %v564, %v565
        %v567 = vrot.slane %v547, 4
        %v568 = vsel %vm558, %v565, %v567
        %v569 = vrot.slane %v424, 4
        %v570 = vrot.slane %v425, 4
        %v571 = vsel %vm558, %v569, %v570
        %v572 = vrot.slane %v548, 4
        %v573 = vsel %vm558, %v570, %v572
        %v580 = vadd.f32 %v540, %v561
        %v581 = vadd.f32 %v541, %v563
        %v582 = vadd.f32 %v542, %v566
        %v583 = vadd.f32 %v543, %v568
        %v584 = vadd.f32 %v544, %v571
        %v585 = vadd.f32 %v545, %v573
        %592 = vrot.lane.b32.xlu0 %v208, 2
        %v593 = vpop.permute.xlu0 %592
        %594 = vrot.lane.b32.xlu0 %v209, 2
        %v595 = vpop.permute.xlu0 %594
        %596 = vrot.lane.b32.xlu0 %v210, 2
        %v597 = vpop.permute.xlu0 %596
        %598 = vrot.lane.b32.xlu0 %v211, 2
        %v599 = vpop.permute.xlu0 %598
        %600 = vrot.lane.b32.xlu0 %v212, 2
        %v601 = vpop.permute.xlu0 %600
        %602 = vrot.lane.b32.xlu0 %v213, 2
        %v603 = vpop.permute.xlu0 %602
        %v610 = vsel %vm243, 0.0, %v593
        %v611 = vsel %vm243, 0.0, %v595
        %v612 = vsel %vm243, 0.0, %v597
        %v613 = vsel %vm243, 0.0, %v599
        %v614 = vsel %vm243, 0.0, %v601
        %v615 = vsel %vm243, 0.0, %v603
        %v616 = vsel %vm250, %v610, 0.0
        %v617 = vsel %vm250, %v611, 0.0
        %v618 = vsel %vm250, %v612, 0.0
        %v619 = vsel %vm250, %v613, 0.0
        %v620 = vsel %vm250, %v614, 0.0
        %v621 = vsel %vm250, %v615, 0.0
        %v622 = vmul.f32 %v616, 0.054488685
        %v623 = vmul.f32 %v617, 0.054488685
        %v624 = vmul.f32 %v618, 0.054488685
        %v625 = vmul.f32 %v619, 0.054488685
        %v626 = vmul.f32 %v620, 0.054488685
        %v627 = vmul.f32 %v621, 0.054488685
        %v628 = vmul.f32 %v616, 0.24420135
        %v629 = vmul.f32 %v617, 0.24420135
        %v630 = vmul.f32 %v618, 0.24420135
        %v631 = vmul.f32 %v619, 0.24420135
        %v632 = vmul.f32 %v620, 0.24420135
        %v633 = vmul.f32 %v621, 0.24420135
        %640 = vrot.lane.b32.xlu0 %v628, 127
        %v641 = vpop.permute.xlu0 %640
        %642 = vrot.lane.b32.xlu0 %v629, 127
        %v643 = vpop.permute.xlu0 %642
        %644 = vrot.lane.b32.xlu0 %v630, 127
        %v645 = vpop.permute.xlu0 %644
        %646 = vrot.lane.b32.xlu0 %v631, 127
        %v647 = vpop.permute.xlu0 %646
        %648 = vrot.lane.b32.xlu0 %v632, 127
        %v649 = vpop.permute.xlu0 %648
        %650 = vrot.lane.b32.xlu0 %v633, 127
        %v651 = vpop.permute.xlu0 %650
        %v658 = vadd.f32 %v622, %v641
        %v659 = vadd.f32 %v623, %v643
        %v660 = vadd.f32 %v624, %v645
        %v661 = vadd.f32 %v625, %v647
        %v662 = vadd.f32 %v626, %v649
        %v663 = vadd.f32 %v627, %v651
        %v664 = vmul.f32 %v616, 0.40261996
        %v665 = vmul.f32 %v617, 0.40261996
        %v666 = vmul.f32 %v618, 0.40261996
        %v667 = vmul.f32 %v619, 0.40261996
        %v668 = vmul.f32 %v620, 0.40261996
        %v669 = vmul.f32 %v621, 0.40261996
        %676 = vrot.lane.b32.xlu0 %v664, 126
        %v677 = vpop.permute.xlu0 %676
        %678 = vrot.lane.b32.xlu0 %v665, 126
        %v679 = vpop.permute.xlu0 %678
        %680 = vrot.lane.b32.xlu0 %v666, 126
        %v681 = vpop.permute.xlu0 %680
        %682 = vrot.lane.b32.xlu0 %v667, 126
        %v683 = vpop.permute.xlu0 %682
        %684 = vrot.lane.b32.xlu0 %v668, 126
        %v685 = vpop.permute.xlu0 %684
        %686 = vrot.lane.b32.xlu0 %v669, 126
        %v687 = vpop.permute.xlu0 %686
        %v694 = vadd.f32 %v658, %v677
        %v695 = vadd.f32 %v659, %v679
        %v696 = vadd.f32 %v660, %v681
        %v697 = vadd.f32 %v661, %v683
        %v698 = vadd.f32 %v662, %v685
        %v699 = vadd.f32 %v663, %v687
        %700 = vrot.lane.b32.xlu0 %v628, 125
        %v701 = vpop.permute.xlu0 %700
        %702 = vrot.lane.b32.xlu0 %v629, 125
        %v703 = vpop.permute.xlu0 %702
        %704 = vrot.lane.b32.xlu0 %v630, 125
        %v705 = vpop.permute.xlu0 %704
        %706 = vrot.lane.b32.xlu0 %v631, 125
        %v707 = vpop.permute.xlu0 %706
        %708 = vrot.lane.b32.xlu0 %v632, 125
        %v709 = vpop.permute.xlu0 %708
        %710 = vrot.lane.b32.xlu0 %v633, 125
        %v711 = vpop.permute.xlu0 %710
        %v718 = vadd.f32 %v694, %v701
        %v719 = vadd.f32 %v695, %v703
        %v720 = vadd.f32 %v696, %v705
        %v721 = vadd.f32 %v697, %v707
        %v722 = vadd.f32 %v698, %v709
        %v723 = vadd.f32 %v699, %v711
        %730 = vrot.lane.b32.xlu0 %v622, 124
        %v731 = vpop.permute.xlu0 %730
        %732 = vrot.lane.b32.xlu0 %v623, 124
        %v733 = vpop.permute.xlu0 %732
        %734 = vrot.lane.b32.xlu0 %v624, 124
        %v735 = vpop.permute.xlu0 %734
        %736 = vrot.lane.b32.xlu0 %v625, 124
        %v737 = vpop.permute.xlu0 %736
        %738 = vrot.lane.b32.xlu0 %v626, 124
        %v739 = vpop.permute.xlu0 %738
        %740 = vrot.lane.b32.xlu0 %v627, 124
        %v741 = vpop.permute.xlu0 %740
        %v748 = vadd.f32 %v718, %v731
        %v749 = vadd.f32 %v719, %v733
        %v750 = vadd.f32 %v720, %v735
        %v751 = vadd.f32 %v721, %v737
        %v752 = vadd.f32 %v722, %v739
        %v753 = vadd.f32 %v723, %v741
        %v760 = vrot.slane %v748, 6
        %v761 = vrot.slane %v749, 6
        %v762 = vsel %vm395, %v760, %v761
        %v763 = vrot.slane %v750, 6
        %v764 = vrot.slane %v751, 6
        %v765 = vsel %vm395, %v763, %v764
        %v766 = vrot.slane %v752, 6
        %v767 = vrot.slane %v753, 6
        %v768 = vsel %vm395, %v766, %v767
        %v778 = vsel %vm395, 0.0, %v760
        %v779 = vsel %vm395, 0.0, %v763
        %v780 = vsel %vm395, 0.0, %v766
        %v781 = vsel %vm395, %v761, 0.0
        %v782 = vsel %vm395, %v764, 0.0
        %v783 = vsel %vm395, %v767, 0.0
        %v784 = vmul.f32 %v778, 0.054488685
        %v785 = vmul.f32 %v762, 0.054488685
        %v786 = vmul.f32 %v779, 0.054488685
        %v787 = vmul.f32 %v765, 0.054488685
        %v788 = vmul.f32 %v780, 0.054488685
        %v789 = vmul.f32 %v768, 0.054488685
        %v790 = vmul.f32 %v778, 0.24420135
        %v791 = vmul.f32 %v762, 0.24420135
        %v792 = vmul.f32 %v781, 0.24420135
        %v793 = vmul.f32 %v779, 0.24420135
        %v794 = vmul.f32 %v765, 0.24420135
        %v795 = vmul.f32 %v782, 0.24420135
        %v796 = vmul.f32 %v780, 0.24420135
        %v797 = vmul.f32 %v768, 0.24420135
        %v798 = vmul.f32 %v783, 0.24420135
        %v808 = vrot.slane %v790, 1
        %v809 = vrot.slane %v791, 1
        %v810 = vsel %vm444, %v808, %v809
        %v811 = vrot.slane %v792, 1
        %v812 = vsel %vm444, %v809, %v811
        %v813 = vrot.slane %v793, 1
        %v814 = vrot.slane %v794, 1
        %v815 = vsel %vm444, %v813, %v814
        %v816 = vrot.slane %v795, 1
        %v817 = vsel %vm444, %v814, %v816
        %v818 = vrot.slane %v796, 1
        %v819 = vrot.slane %v797, 1
        %v820 = vsel %vm444, %v818, %v819
        %v821 = vrot.slane %v798, 1
        %v822 = vsel %vm444, %v819, %v821
        %v829 = vadd.f32 %v784, %v810
        %v830 = vadd.f32 %v785, %v812
        %v831 = vadd.f32 %v786, %v815
        %v832 = vadd.f32 %v787, %v817
        %v833 = vadd.f32 %v788, %v820
        %v834 = vadd.f32 %v789, %v822
        %v835 = vmul.f32 %v778, 0.40261996
        %v836 = vmul.f32 %v762, 0.40261996
        %v837 = vmul.f32 %v781, 0.40261996
        %v838 = vmul.f32 %v779, 0.40261996
        %v839 = vmul.f32 %v765, 0.40261996
        %v840 = vmul.f32 %v782, 0.40261996
        %v841 = vmul.f32 %v780, 0.40261996
        %v842 = vmul.f32 %v768, 0.40261996
        %v843 = vmul.f32 %v783, 0.40261996
        %v853 = vrot.slane %v835, 2
        %v854 = vrot.slane %v836, 2
        %v855 = vsel %vm490, %v853, %v854
        %v856 = vrot.slane %v837, 2
        %v857 = vsel %vm490, %v854, %v856
        %v858 = vrot.slane %v838, 2
        %v859 = vrot.slane %v839, 2
        %v860 = vsel %vm490, %v858, %v859
        %v861 = vrot.slane %v840, 2
        %v862 = vsel %vm490, %v859, %v861
        %v863 = vrot.slane %v841, 2
        %v864 = vrot.slane %v842, 2
        %v865 = vsel %vm490, %v863, %v864
        %v866 = vrot.slane %v843, 2
        %v867 = vsel %vm490, %v864, %v866
        %v874 = vadd.f32 %v829, %v855
        %v875 = vadd.f32 %v830, %v857
        %v876 = vadd.f32 %v831, %v860
        %v877 = vadd.f32 %v832, %v862
        %v878 = vadd.f32 %v833, %v865
        %v879 = vadd.f32 %v834, %v867
        %v880 = vrot.slane %v790, 3
        %v881 = vrot.slane %v791, 3
        %v882 = vsel %vm518, %v880, %v881
        %v883 = vrot.slane %v792, 3
        %v884 = vsel %vm518, %v881, %v883
        %v885 = vrot.slane %v793, 3
        %v886 = vrot.slane %v794, 3
        %v887 = vsel %vm518, %v885, %v886
        %v888 = vrot.slane %v795, 3
        %v889 = vsel %vm518, %v886, %v888
        %v890 = vrot.slane %v796, 3
        %v891 = vrot.slane %v797, 3
        %v892 = vsel %vm518, %v890, %v891
        %v893 = vrot.slane %v798, 3
        %v894 = vsel %vm518, %v891, %v893
        %v901 = vadd.f32 %v874, %v882
        %v902 = vadd.f32 %v875, %v884
        %v903 = vadd.f32 %v876, %v887
        %v904 = vadd.f32 %v877, %v889
        %v905 = vadd.f32 %v878, %v892
        %v906 = vadd.f32 %v879, %v894
        %v907 = vmul.f32 %v781, 0.054488685
        %v908 = vmul.f32 %v782, 0.054488685
        %v909 = vmul.f32 %v783, 0.054488685
        %v919 = vrot.slane %v784, 4
        %v920 = vrot.slane %v785, 4
        %v921 = vsel %vm558, %v919, %v920
        %v922 = vrot.slane %v907, 4
        %v923 = vsel %vm558, %v920, %v922
        %v924 = vrot.slane %v786, 4
        %v925 = vrot.slane %v787, 4
        %v926 = vsel %vm558, %v924, %v925
        %v927 = vrot.slane %v908, 4
        %v928 = vsel %vm558, %v925, %v927
        %v929 = vrot.slane %v788, 4
        %v930 = vrot.slane %v789, 4
        %v931 = vsel %vm558, %v929, %v930
        %v932 = vrot.slane %v909, 4
        %v933 = vsel %vm558, %v930, %v932
        %v940 = vadd.f32 %v901, %v921
        %v941 = vadd.f32 %v902, %v923
        %v942 = vadd.f32 %v903, %v926
        %v943 = vadd.f32 %v904, %v928
        %v944 = vadd.f32 %v905, %v931
        %v945 = vadd.f32 %v906, %v933
        %v946 = vand.u32 %v215, 1
        %v947 = vand.u32 %v216, 1
        %vm948 = vcmp.eq.s32.totalorder %v946, 0
        %vm949 = vcmp.eq.s32.totalorder %v947, 0
        %v950 = vand.u32 %v218, 1
        %vm951 = vcmp.eq.s32.totalorder %v950, 0
        %958 = vrot.lane.b32.xlu0 %v580, 1
        %v959 = vpop.permute.xlu0 %958
        %960 = vrot.lane.b32.xlu0 %v581, 1
        %v961 = vpop.permute.xlu0 %960
        %962 = vrot.lane.b32.xlu0 %v582, 1
        %v963 = vpop.permute.xlu0 %962
        %964 = vrot.lane.b32.xlu0 %v583, 1
        %v965 = vpop.permute.xlu0 %964
        %966 = vrot.lane.b32.xlu0 %v584, 1
        %v967 = vpop.permute.xlu0 %966
        %968 = vrot.lane.b32.xlu0 %v585, 1
        %v969 = vpop.permute.xlu0 %968
        %vm976 = vcmask 7168
        %v977 = vsel %vm976, %v580, %v959
        %v978 = vsel %vm976, %v581, %v961
        %v979 = vsel %vm976, %v582, %v963
        %v980 = vsel %vm976, %v583, %v965
        %v981 = vsel %vm976, %v584, %v967
        %v982 = vsel %vm976, %v585, %v969
        %v983 = vsel %vm951, %v580, %v977
        %v984 = vsel %vm951, %v581, %v978
        %v985 = vsel %vm951, %v582, %v979
        %v986 = vsel %vm951, %v583, %v980
        %v987 = vsel %vm951, %v584, %v981
        %v988 = vsel %vm951, %v585, %v982
        %vm995 = vcmask 1040384
        %v996 = vrot.slane %v983, 7
        %v997 = vrot.slane %v984, 7
        %v998 = vsel %vm995, %v996, %v997
        %v999 = vrot.slane %v985, 7
        %v1000 = vrot.slane %v986, 7
        %v1001 = vsel %vm995, %v999, %v1000
        %v1002 = vrot.slane %v987, 7
        %v1003 = vrot.slane %v988, 7
        %v1004 = vsel %vm995, %v1002, %v1003
        %v1011 = vsel %vm995, %v983, %v996
        %v1012 = vsel %vm995, %v985, %v999
        %v1013 = vsel %vm995, %v987, %v1002
        %v1014 = vsel %vm948, %v983, %v1011
        %v1015 = vsel %vm949, %v984, %v998
        %v1016 = vsel %vm948, %v985, %v1012
        %v1017 = vsel %vm949, %v986, %v1001
        %v1018 = vsel %vm948, %v987, %v1013
        %v1019 = vsel %vm949, %v988, %v1004
        %v1020 = vsub.f32 %v202, %v1014
        %v1021 = vsub.f32 %v203, %v1015
        %v1022 = vsub.f32 %v204, %v1016
        %v1023 = vsub.f32 %v205, %v1017
        %v1024 = vsub.f32 %v206, %v1018
        %v1025 = vsub.f32 %v207, %v1019
        %v1026 = vand.u32 2147483647, %v1020
        %v1027 = vand.u32 2147483647, %v1021
        %v1028 = vand.u32 2147483647, %v1022
        %v1029 = vand.u32 2147483647, %v1023
        %v1030 = vand.u32 2147483647, %v1024
        %v1031 = vand.u32 2147483647, %v1025
        %vm1032 = vcmask 130048
        %v1033 = vsel %vm1032, %v1026, 0.0
        %v1034 = vsel %vm1032, %v1028, 0.0
        %v1035 = vadd.f32 %v1033, %v1034
        %v1036 = vsel %vm1032, %v1030, 0.0
        %v1037 = vadd.f32 %v1035, %v1036
        %v1038 = vsel %vm1032, %v1027, 0.0
        %v1039 = vsel %vm1032, %v1029, 0.0
        %v1040 = vadd.f32 %v1038, %v1039
        %v1041 = vsel %vm1032, %v1031, 0.0
        %v1042 = vadd.f32 %v1040, %v1041
        %v1043 = vrcp.pop 3.0
        %v1044 = vmul.f32 %v1037, %v1043
        %v1045 = vmul.f32 %v1042, %v1043
        %1052 = vrot.lane.b32.xlu0 %v940, 1
        %v1053 = vpop.permute.xlu0 %1052
        %1054 = vrot.lane.b32.xlu0 %v941, 1
        %v1055 = vpop.permute.xlu0 %1054
        %1056 = vrot.lane.b32.xlu0 %v942, 1
        %v1057 = vpop.permute.xlu0 %1056
        %1058 = vrot.lane.b32.xlu0 %v943, 1
        %v1059 = vpop.permute.xlu0 %1058
        %1060 = vrot.lane.b32.xlu0 %v944, 1
        %v1061 = vpop.permute.xlu0 %1060
        %1062 = vrot.lane.b32.xlu0 %v945, 1
        %v1063 = vpop.permute.xlu0 %1062
        %v1070 = vsel %vm976, %v940, %v1053
        %v1071 = vsel %vm976, %v941, %v1055
        %v1072 = vsel %vm976, %v942, %v1057
        %v1073 = vsel %vm976, %v943, %v1059
        %v1074 = vsel %vm976, %v944, %v1061
        %v1075 = vsel %vm976, %v945, %v1063
        %v1076 = vsel %vm951, %v940, %v1070
        %v1077 = vsel %vm951, %v941, %v1071
        %v1078 = vsel %vm951, %v942, %v1072
        %v1079 = vsel %vm951, %v943, %v1073
        %v1080 = vsel %vm951, %v944, %v1074
        %v1081 = vsel %vm951, %v945, %v1075
        %v1088 = vrot.slane %v1076, 7
        %v1089 = vrot.slane %v1077, 7
        %v1090 = vsel %vm995, %v1088, %v1089
        %v1091 = vrot.slane %v1078, 7
        %v1092 = vrot.slane %v1079, 7
        %v1093 = vsel %vm995, %v1091, %v1092
        %v1094 = vrot.slane %v1080, 7
        %v1095 = vrot.slane %v1081, 7
        %v1096 = vsel %vm995, %v1094, %v1095
        %v1103 = vsel %vm995, %v1076, %v1088
        %v1104 = vsel %vm995, %v1078, %v1091
        %v1105 = vsel %vm995, %v1080, %v1094
        %v1106 = vsel %vm948, %v1076, %v1103
        %v1107 = vsel %vm949, %v1077, %v1090
        %v1108 = vsel %vm948, %v1078, %v1104
        %v1109 = vsel %vm949, %v1079, %v1093
        %v1110 = vsel %vm948, %v1080, %v1105
        %v1111 = vsel %vm949, %v1081, %v1096
        %v1112 = vsub.f32 %v208, %v1106
        %v1113 = vsub.f32 %v209, %v1107
        %v1114 = vsub.f32 %v210, %v1108
        %v1115 = vsub.f32 %v211, %v1109
        %v1116 = vsub.f32 %v212, %v1110
        %v1117 = vsub.f32 %v213, %v1111
        %v1118 = vand.u32 2147483647, %v1112
        %v1119 = vand.u32 2147483647, %v1113
        %v1120 = vand.u32 2147483647, %v1114
        %v1121 = vand.u32 2147483647, %v1115
        %v1122 = vand.u32 2147483647, %v1116
        %v1123 = vand.u32 2147483647, %v1117
        %v1124 = vsel %vm1032, %v1118, 0.0
        %v1125 = vsel %vm1032, %v1120, 0.0
        %v1126 = vadd.f32 %v1124, %v1125
        %v1127 = vsel %vm1032, %v1122, 0.0
        %v1128 = vadd.f32 %v1126, %v1127
        %v1129 = vsel %vm1032, %v1119, 0.0
        %v1130 = vsel %vm1032, %v1121, 0.0
        %v1131 = vadd.f32 %v1129, %v1130
        %v1132 = vsel %vm1032, %v1123, 0.0
        %v1133 = vadd.f32 %v1131, %v1132
        %v1134 = vmul.f32 %v1128, %v1043
        %v1135 = vmul.f32 %v1133, %v1043
        %v1136 = vsub.f32 %v1044, %v1134
        %v1137 = vsub.f32 %v1045, %v1135
        %v1138 = vand.u32 2147483647, %v1136
        %v1139 = vand.u32 2147483647, %v1137
        %v1140 = vsel %vm1032, %v1138, 0.0
        %v1141 = vsel %vm1032, %v1139, 0.0
        %v1142 = vadd.f32 %v1140, %v1141
        %1143 = vadd.xlane.f32.xlu0 %v1142
        %v1144 = vpop.xlane.xlu0 %1143
        %v1145 = vrot.slane %v1144, 4
        %v1146 = vadd.f32 %v1144, %v1145
        %v1147 = vrot.slane %v1146, 2
        %v1148 = vadd.f32 %v1146, %v1147
        %v1149 = vrot.slane %v1148, 1
        %v1150 = vadd.f32 %v1148, %v1149
        %s1151 = vtos %v1150
        %v1152 = vrcp.pop 256.0
        %s1153 = vtos %v1152
        %s1154 = smul.f32 %s1151, %s1153
        %s1155 = sadd.f32 %s1154, 0.0
        %1156 = vrot.lane.b32.xlu0 %v580, 4
        %v1157 = vpop.permute.xlu0 %1156
        %1158 = vrot.lane.b32.xlu0 %v581, 4
        %v1159 = vpop.permute.xlu0 %1158
        %1160 = vrot.lane.b32.xlu0 %v582, 4
        %v1161 = vpop.permute.xlu0 %1160
        %1162 = vrot.lane.b32.xlu0 %v583, 4
        %v1163 = vpop.permute.xlu0 %1162
        %1164 = vrot.lane.b32.xlu0 %v584, 4
        %v1165 = vpop.permute.xlu0 %1164
        %1166 = vrot.lane.b32.xlu0 %v585, 4
        %v1167 = vpop.permute.xlu0 %1166
        %vm1174 = vcmask 31744
        %v1175 = vsel %vm1174, 0.0, %v1157
        %v1176 = vsel %vm1174, 0.0, %v1159
        %v1177 = vsel %vm1174, 0.0, %v1161
        %v1178 = vsel %vm1174, 0.0, %v1163
        %v1179 = vsel %vm1174, 0.0, %v1165
        %v1180 = vsel %vm1174, 0.0, %v1167
        %vm1181 = vcmask 162816
        %v1182 = vsel %vm1181, %v1175, 0.0
        %v1183 = vsel %vm1181, %v1176, 0.0
        %v1184 = vsel %vm1181, %v1177, 0.0
        %v1185 = vsel %vm1181, %v1178, 0.0
        %v1186 = vsel %vm1181, %v1179, 0.0
        %v1187 = vsel %vm1181, %v1180, 0.0
        %v1188 = vmul.f32 %v1182, 0.054488685
        %v1189 = vmul.f32 %v1183, 0.054488685
        %v1190 = vmul.f32 %v1184, 0.054488685
        %v1191 = vmul.f32 %v1185, 0.054488685
        %v1192 = vmul.f32 %v1186, 0.054488685
        %v1193 = vmul.f32 %v1187, 0.054488685
        %v1194 = vmul.f32 %v1182, 0.24420135
        %v1195 = vmul.f32 %v1183, 0.24420135
        %v1196 = vmul.f32 %v1184, 0.24420135
        %v1197 = vmul.f32 %v1185, 0.24420135
        %v1198 = vmul.f32 %v1186, 0.24420135
        %v1199 = vmul.f32 %v1187, 0.24420135
        %1206 = vrot.lane.b32.xlu0 %v1194, 126
        %v1207 = vpop.permute.xlu0 %1206
        %1208 = vrot.lane.b32.xlu0 %v1195, 126
        %v1209 = vpop.permute.xlu0 %1208
        %1210 = vrot.lane.b32.xlu0 %v1196, 126
        %v1211 = vpop.permute.xlu0 %1210
        %1212 = vrot.lane.b32.xlu0 %v1197, 126
        %v1213 = vpop.permute.xlu0 %1212
        %1214 = vrot.lane.b32.xlu0 %v1198, 126
        %v1215 = vpop.permute.xlu0 %1214
        %1216 = vrot.lane.b32.xlu0 %v1199, 126
        %v1217 = vpop.permute.xlu0 %1216
        %v1224 = vadd.f32 %v1188, %v1207
        %v1225 = vadd.f32 %v1189, %v1209
        %v1226 = vadd.f32 %v1190, %v1211
        %v1227 = vadd.f32 %v1191, %v1213
        %v1228 = vadd.f32 %v1192, %v1215
        %v1229 = vadd.f32 %v1193, %v1217
        %v1230 = vmul.f32 %v1182, 0.40261996
        %v1231 = vmul.f32 %v1183, 0.40261996
        %v1232 = vmul.f32 %v1184, 0.40261996
        %v1233 = vmul.f32 %v1185, 0.40261996
        %v1234 = vmul.f32 %v1186, 0.40261996
        %v1235 = vmul.f32 %v1187, 0.40261996
        %1242 = vrot.lane.b32.xlu0 %v1230, 124
        %v1243 = vpop.permute.xlu0 %1242
        %1244 = vrot.lane.b32.xlu0 %v1231, 124
        %v1245 = vpop.permute.xlu0 %1244
        %1246 = vrot.lane.b32.xlu0 %v1232, 124
        %v1247 = vpop.permute.xlu0 %1246
        %1248 = vrot.lane.b32.xlu0 %v1233, 124
        %v1249 = vpop.permute.xlu0 %1248
        %1250 = vrot.lane.b32.xlu0 %v1234, 124
        %v1251 = vpop.permute.xlu0 %1250
        %1252 = vrot.lane.b32.xlu0 %v1235, 124
        %v1253 = vpop.permute.xlu0 %1252
        %v1260 = vadd.f32 %v1224, %v1243
        %v1261 = vadd.f32 %v1225, %v1245
        %v1262 = vadd.f32 %v1226, %v1247
        %v1263 = vadd.f32 %v1227, %v1249
        %v1264 = vadd.f32 %v1228, %v1251
        %v1265 = vadd.f32 %v1229, %v1253
        %1266 = vrot.lane.b32.xlu0 %v1194, 122
        %v1267 = vpop.permute.xlu0 %1266
        %1268 = vrot.lane.b32.xlu0 %v1195, 122
        %v1269 = vpop.permute.xlu0 %1268
        %1270 = vrot.lane.b32.xlu0 %v1196, 122
        %v1271 = vpop.permute.xlu0 %1270
        %1272 = vrot.lane.b32.xlu0 %v1197, 122
        %v1273 = vpop.permute.xlu0 %1272
        %1274 = vrot.lane.b32.xlu0 %v1198, 122
        %v1275 = vpop.permute.xlu0 %1274
        %1276 = vrot.lane.b32.xlu0 %v1199, 122
        %v1277 = vpop.permute.xlu0 %1276
        %v1284 = vadd.f32 %v1260, %v1267
        %v1285 = vadd.f32 %v1261, %v1269
        %v1286 = vadd.f32 %v1262, %v1271
        %v1287 = vadd.f32 %v1263, %v1273
        %v1288 = vadd.f32 %v1264, %v1275
        %v1289 = vadd.f32 %v1265, %v1277
        %1296 = vrot.lane.b32.xlu0 %v1188, 120
        %v1297 = vpop.permute.xlu0 %1296
        %1298 = vrot.lane.b32.xlu0 %v1189, 120
        %v1299 = vpop.permute.xlu0 %1298
        %1300 = vrot.lane.b32.xlu0 %v1190, 120
        %v1301 = vpop.permute.xlu0 %1300
        %1302 = vrot.lane.b32.xlu0 %v1191, 120
        %v1303 = vpop.permute.xlu0 %1302
        %1304 = vrot.lane.b32.xlu0 %v1192, 120
        %v1305 = vpop.permute.xlu0 %1304
        %1306 = vrot.lane.b32.xlu0 %v1193, 120
        %v1307 = vpop.permute.xlu0 %1306
        %v1314 = vadd.f32 %v1284, %v1297
        %v1315 = vadd.f32 %v1285, %v1299
        %v1316 = vadd.f32 %v1286, %v1301
        %v1317 = vadd.f32 %v1287, %v1303
        %v1318 = vadd.f32 %v1288, %v1305
        %v1319 = vadd.f32 %v1289, %v1307
        %v1326 = vrot.slane %v1314, 4
        %v1327 = vrot.slane %v1315, 4
        %v1328 = vsel %vm558, %v1326, %v1327
        %v1329 = vrot.slane %v1316, 4
        %v1330 = vrot.slane %v1317, 4
        %v1331 = vsel %vm558, %v1329, %v1330
        %v1332 = vrot.slane %v1318, 4
        %v1333 = vrot.slane %v1319, 4
        %v1334 = vsel %vm558, %v1332, %v1333
        %v1344 = vsel %vm558, 0.0, %v1326
        %v1345 = vsel %vm558, 0.0, %v1329
        %v1346 = vsel %vm558, 0.0, %v1332
        %v1347 = vsel %vm558, %v1327, 0.0
        %v1348 = vsel %vm558, %v1330, 0.0
        %v1349 = vsel %vm558, %v1333, 0.0
        %v1350 = vmul.f32 %v1344, 0.054488685
        %v1351 = vmul.f32 %v1328, 0.054488685
        %v1352 = vmul.f32 %v1345, 0.054488685
        %v1353 = vmul.f32 %v1331, 0.054488685
        %v1354 = vmul.f32 %v1346, 0.054488685
        %v1355 = vmul.f32 %v1334, 0.054488685
        %v1356 = vmul.f32 %v1344, 0.24420135
        %v1357 = vmul.f32 %v1328, 0.24420135
        %v1358 = vmul.f32 %v1347, 0.24420135
        %v1359 = vmul.f32 %v1345, 0.24420135
        %v1360 = vmul.f32 %v1331, 0.24420135
        %v1361 = vmul.f32 %v1348, 0.24420135
        %v1362 = vmul.f32 %v1346, 0.24420135
        %v1363 = vmul.f32 %v1334, 0.24420135
        %v1364 = vmul.f32 %v1349, 0.24420135
        %v1374 = vrot.slane %v1356, 2
        %v1375 = vrot.slane %v1357, 2
        %v1376 = vsel %vm490, %v1374, %v1375
        %v1377 = vrot.slane %v1358, 2
        %v1378 = vsel %vm490, %v1375, %v1377
        %v1379 = vrot.slane %v1359, 2
        %v1380 = vrot.slane %v1360, 2
        %v1381 = vsel %vm490, %v1379, %v1380
        %v1382 = vrot.slane %v1361, 2
        %v1383 = vsel %vm490, %v1380, %v1382
        %v1384 = vrot.slane %v1362, 2
        %v1385 = vrot.slane %v1363, 2
        %v1386 = vsel %vm490, %v1384, %v1385
        %v1387 = vrot.slane %v1364, 2
        %v1388 = vsel %vm490, %v1385, %v1387
        %v1395 = vadd.f32 %v1350, %v1376
        %v1396 = vadd.f32 %v1351, %v1378
        %v1397 = vadd.f32 %v1352, %v1381
        %v1398 = vadd.f32 %v1353, %v1383
        %v1399 = vadd.f32 %v1354, %v1386
        %v1400 = vadd.f32 %v1355, %v1388
        %v1401 = vmul.f32 %v1344, 0.40261996
        %v1402 = vmul.f32 %v1328, 0.40261996
        %v1403 = vmul.f32 %v1347, 0.40261996
        %v1404 = vmul.f32 %v1345, 0.40261996
        %v1405 = vmul.f32 %v1331, 0.40261996
        %v1406 = vmul.f32 %v1348, 0.40261996
        %v1407 = vmul.f32 %v1346, 0.40261996
        %v1408 = vmul.f32 %v1334, 0.40261996
        %v1409 = vmul.f32 %v1349, 0.40261996
        %v1419 = vrot.slane %v1401, 4
        %v1420 = vrot.slane %v1402, 4
        %v1421 = vsel %vm558, %v1419, %v1420
        %v1422 = vrot.slane %v1403, 4
        %v1423 = vsel %vm558, %v1420, %v1422
        %v1424 = vrot.slane %v1404, 4
        %v1425 = vrot.slane %v1405, 4
        %v1426 = vsel %vm558, %v1424, %v1425
        %v1427 = vrot.slane %v1406, 4
        %v1428 = vsel %vm558, %v1425, %v1427
        %v1429 = vrot.slane %v1407, 4
        %v1430 = vrot.slane %v1408, 4
        %v1431 = vsel %vm558, %v1429, %v1430
        %v1432 = vrot.slane %v1409, 4
        %v1433 = vsel %vm558, %v1430, %v1432
        %v1440 = vadd.f32 %v1395, %v1421
        %v1441 = vadd.f32 %v1396, %v1423
        %v1442 = vadd.f32 %v1397, %v1426
        %v1443 = vadd.f32 %v1398, %v1428
        %v1444 = vadd.f32 %v1399, %v1431
        %v1445 = vadd.f32 %v1400, %v1433
        %v1446 = vrot.slane %v1356, 6
        %v1447 = vrot.slane %v1357, 6
        %v1448 = vsel %vm395, %v1446, %v1447
        %v1449 = vrot.slane %v1358, 6
        %v1450 = vsel %vm395, %v1447, %v1449
        %v1451 = vrot.slane %v1359, 6
        %v1452 = vrot.slane %v1360, 6
        %v1453 = vsel %vm395, %v1451, %v1452
        %v1454 = vrot.slane %v1361, 6
        %v1455 = vsel %vm395, %v1452, %v1454
        %v1456 = vrot.slane %v1362, 6
        %v1457 = vrot.slane %v1363, 6
        %v1458 = vsel %vm395, %v1456, %v1457
        %v1459 = vrot.slane %v1364, 6
        %v1460 = vsel %vm395, %v1457, %v1459
        %v1467 = vadd.f32 %v1440, %v1448
        %v1468 = vadd.f32 %v1441, %v1450
        %v1469 = vadd.f32 %v1442, %v1453
        %v1470 = vadd.f32 %v1443, %v1455
        %v1471 = vadd.f32 %v1444, %v1458
        %v1472 = vadd.f32 %v1445, %v1460
        %v1473 = vmul.f32 %v1347, 0.054488685
        %v1474 = vmul.f32 %v1348, 0.054488685
        %v1475 = vmul.f32 %v1349, 0.054488685
        %v1476 = vadd.f32 %v1467, %v1351
        %v1477 = vadd.f32 %v1468, %v1473
        %v1478 = vadd.f32 %v1469, %v1353
        %v1479 = vadd.f32 %v1470, %v1474
        %v1480 = vadd.f32 %v1471, %v1355
        %v1481 = vadd.f32 %v1472, %v1475
        %1482 = vrot.lane.b32.xlu0 %v940, 4
        %v1483 = vpop.permute.xlu0 %1482
        %1484 = vrot.lane.b32.xlu0 %v941, 4
        %v1485 = vpop.permute.xlu0 %1484
        %1486 = vrot.lane.b32.xlu0 %v942, 4
        %v1487 = vpop.permute.xlu0 %1486
        %1488 = vrot.lane.b32.xlu0 %v943, 4
        %v1489 = vpop.permute.xlu0 %1488
        %1490 = vrot.lane.b32.xlu0 %v944, 4
        %v1491 = vpop.permute.xlu0 %1490
        %1492 = vrot.lane.b32.xlu0 %v945, 4
        %v1493 = vpop.permute.xlu0 %1492
        %v1500 = vsel %vm1174, 0.0, %v1483
        %v1501 = vsel %vm1174, 0.0, %v1485
        %v1502 = vsel %vm1174, 0.0, %v1487
        %v1503 = vsel %vm1174, 0.0, %v1489
        %v1504 = vsel %vm1174, 0.0, %v1491
        %v1505 = vsel %vm1174, 0.0, %v1493
        %v1506 = vsel %vm1181, %v1500, 0.0
        %v1507 = vsel %vm1181, %v1501, 0.0
        %v1508 = vsel %vm1181, %v1502, 0.0
        %v1509 = vsel %vm1181, %v1503, 0.0
        %v1510 = vsel %vm1181, %v1504, 0.0
        %v1511 = vsel %vm1181, %v1505, 0.0
        %v1512 = vmul.f32 %v1506, 0.054488685
        %v1513 = vmul.f32 %v1507, 0.054488685
        %v1514 = vmul.f32 %v1508, 0.054488685
        %v1515 = vmul.f32 %v1509, 0.054488685
        %v1516 = vmul.f32 %v1510, 0.054488685
        %v1517 = vmul.f32 %v1511, 0.054488685
        %v1518 = vmul.f32 %v1506, 0.24420135
        %v1519 = vmul.f32 %v1507, 0.24420135
        %v1520 = vmul.f32 %v1508, 0.24420135
        %v1521 = vmul.f32 %v1509, 0.24420135
        %v1522 = vmul.f32 %v1510, 0.24420135
        %v1523 = vmul.f32 %v1511, 0.24420135
        %1530 = vrot.lane.b32.xlu0 %v1518, 126
        %v1531 = vpop.permute.xlu0 %1530
        %1532 = vrot.lane.b32.xlu0 %v1519, 126
        %v1533 = vpop.permute.xlu0 %1532
        %1534 = vrot.lane.b32.xlu0 %v1520, 126
        %v1535 = vpop.permute.xlu0 %1534
        %1536 = vrot.lane.b32.xlu0 %v1521, 126
        %v1537 = vpop.permute.xlu0 %1536
        %1538 = vrot.lane.b32.xlu0 %v1522, 126
        %v1539 = vpop.permute.xlu0 %1538
        %1540 = vrot.lane.b32.xlu0 %v1523, 126
        %v1541 = vpop.permute.xlu0 %1540
        %v1548 = vadd.f32 %v1512, %v1531
        %v1549 = vadd.f32 %v1513, %v1533
        %v1550 = vadd.f32 %v1514, %v1535
        %v1551 = vadd.f32 %v1515, %v1537
        %v1552 = vadd.f32 %v1516, %v1539
        %v1553 = vadd.f32 %v1517, %v1541
        %v1554 = vmul.f32 %v1506, 0.40261996
        %v1555 = vmul.f32 %v1507, 0.40261996
        %v1556 = vmul.f32 %v1508, 0.40261996
        %v1557 = vmul.f32 %v1509, 0.40261996
        %v1558 = vmul.f32 %v1510, 0.40261996
        %v1559 = vmul.f32 %v1511, 0.40261996
        %1566 = vrot.lane.b32.xlu0 %v1554, 124
        %v1567 = vpop.permute.xlu0 %1566
        %1568 = vrot.lane.b32.xlu0 %v1555, 124
        %v1569 = vpop.permute.xlu0 %1568
        %1570 = vrot.lane.b32.xlu0 %v1556, 124
        %v1571 = vpop.permute.xlu0 %1570
        %1572 = vrot.lane.b32.xlu0 %v1557, 124
        %v1573 = vpop.permute.xlu0 %1572
        %1574 = vrot.lane.b32.xlu0 %v1558, 124
        %v1575 = vpop.permute.xlu0 %1574
        %1576 = vrot.lane.b32.xlu0 %v1559, 124
        %v1577 = vpop.permute.xlu0 %1576
        %v1584 = vadd.f32 %v1548, %v1567
        %v1585 = vadd.f32 %v1549, %v1569
        %v1586 = vadd.f32 %v1550, %v1571
        %v1587 = vadd.f32 %v1551, %v1573
        %v1588 = vadd.f32 %v1552, %v1575
        %v1589 = vadd.f32 %v1553, %v1577
        %1590 = vrot.lane.b32.xlu0 %v1518, 122
        %v1591 = vpop.permute.xlu0 %1590
        %1592 = vrot.lane.b32.xlu0 %v1519, 122
        %v1593 = vpop.permute.xlu0 %1592
        %1594 = vrot.lane.b32.xlu0 %v1520, 122
        %v1595 = vpop.permute.xlu0 %1594
        %1596 = vrot.lane.b32.xlu0 %v1521, 122
        %v1597 = vpop.permute.xlu0 %1596
        %1598 = vrot.lane.b32.xlu0 %v1522, 122
        %v1599 = vpop.permute.xlu0 %1598
        %1600 = vrot.lane.b32.xlu0 %v1523, 122
        %v1601 = vpop.permute.xlu0 %1600
        %v1608 = vadd.f32 %v1584, %v1591
        %v1609 = vadd.f32 %v1585, %v1593
        %v1610 = vadd.f32 %v1586, %v1595
        %v1611 = vadd.f32 %v1587, %v1597
        %v1612 = vadd.f32 %v1588, %v1599
        %v1613 = vadd.f32 %v1589, %v1601
        %1620 = vrot.lane.b32.xlu0 %v1512, 120
        %v1621 = vpop.permute.xlu0 %1620
        %1622 = vrot.lane.b32.xlu0 %v1513, 120
        %v1623 = vpop.permute.xlu0 %1622
        %1624 = vrot.lane.b32.xlu0 %v1514, 120
        %v1625 = vpop.permute.xlu0 %1624
        %1626 = vrot.lane.b32.xlu0 %v1515, 120
        %v1627 = vpop.permute.xlu0 %1626
        %1628 = vrot.lane.b32.xlu0 %v1516, 120
        %v1629 = vpop.permute.xlu0 %1628
        %1630 = vrot.lane.b32.xlu0 %v1517, 120
        %v1631 = vpop.permute.xlu0 %1630
        %v1638 = vadd.f32 %v1608, %v1621
        %v1639 = vadd.f32 %v1609, %v1623
        %v1640 = vadd.f32 %v1610, %v1625
        %v1641 = vadd.f32 %v1611, %v1627
        %v1642 = vadd.f32 %v1612, %v1629
        %v1643 = vadd.f32 %v1613, %v1631
        %v1650 = vrot.slane %v1638, 4
        %v1651 = vrot.slane %v1639, 4
        %v1652 = vsel %vm558, %v1650, %v1651
        %v1653 = vrot.slane %v1640, 4
        %v1654 = vrot.slane %v1641, 4
        %v1655 = vsel %vm558, %v1653, %v1654
        %v1656 = vrot.slane %v1642, 4
        %v1657 = vrot.slane %v1643, 4
        %v1658 = vsel %vm558, %v1656, %v1657
        %v1668 = vsel %vm558, 0.0, %v1650
        %v1669 = vsel %vm558, 0.0, %v1653
        %v1670 = vsel %vm558, 0.0, %v1656
        %v1671 = vsel %vm558, %v1651, 0.0
        %v1672 = vsel %vm558, %v1654, 0.0
        %v1673 = vsel %vm558, %v1657, 0.0
        %v1674 = vmul.f32 %v1668, 0.054488685
        %v1675 = vmul.f32 %v1652, 0.054488685
        %v1676 = vmul.f32 %v1669, 0.054488685
        %v1677 = vmul.f32 %v1655, 0.054488685
        %v1678 = vmul.f32 %v1670, 0.054488685
        %v1679 = vmul.f32 %v1658, 0.054488685
        %v1680 = vmul.f32 %v1668, 0.24420135
        %v1681 = vmul.f32 %v1652, 0.24420135
        %v1682 = vmul.f32 %v1671, 0.24420135
        %v1683 = vmul.f32 %v1669, 0.24420135
        %v1684 = vmul.f32 %v1655, 0.24420135
        %v1685 = vmul.f32 %v1672, 0.24420135
        %v1686 = vmul.f32 %v1670, 0.24420135
        %v1687 = vmul.f32 %v1658, 0.24420135
        %v1688 = vmul.f32 %v1673, 0.24420135
        %v1698 = vrot.slane %v1680, 2
        %v1699 = vrot.slane %v1681, 2
        %v1700 = vsel %vm490, %v1698, %v1699
        %v1701 = vrot.slane %v1682, 2
        %v1702 = vsel %vm490, %v1699, %v1701
        %v1703 = vrot.slane %v1683, 2
        %v1704 = vrot.slane %v1684, 2
        %v1705 = vsel %vm490, %v1703, %v1704
        %v1706 = vrot.slane %v1685, 2
        %v1707 = vsel %vm490, %v1704, %v1706
        %v1708 = vrot.slane %v1686, 2
        %v1709 = vrot.slane %v1687, 2
        %v1710 = vsel %vm490, %v1708, %v1709
        %v1711 = vrot.slane %v1688, 2
        %v1712 = vsel %vm490, %v1709, %v1711
        %v1719 = vadd.f32 %v1674, %v1700
        %v1720 = vadd.f32 %v1675, %v1702
        %v1721 = vadd.f32 %v1676, %v1705
        %v1722 = vadd.f32 %v1677, %v1707
        %v1723 = vadd.f32 %v1678, %v1710
        %v1724 = vadd.f32 %v1679, %v1712
        %v1725 = vmul.f32 %v1668, 0.40261996
        %v1726 = vmul.f32 %v1652, 0.40261996
        %v1727 = vmul.f32 %v1671, 0.40261996
        %v1728 = vmul.f32 %v1669, 0.40261996
        %v1729 = vmul.f32 %v1655, 0.40261996
        %v1730 = vmul.f32 %v1672, 0.40261996
        %v1731 = vmul.f32 %v1670, 0.40261996
        %v1732 = vmul.f32 %v1658, 0.40261996
        %v1733 = vmul.f32 %v1673, 0.40261996
        %v1743 = vrot.slane %v1725, 4
        %v1744 = vrot.slane %v1726, 4
        %v1745 = vsel %vm558, %v1743, %v1744
        %v1746 = vrot.slane %v1727, 4
        %v1747 = vsel %vm558, %v1744, %v1746
        %v1748 = vrot.slane %v1728, 4
        %v1749 = vrot.slane %v1729, 4
        %v1750 = vsel %vm558, %v1748, %v1749
        %v1751 = vrot.slane %v1730, 4
        %v1752 = vsel %vm558, %v1749, %v1751
        %v1753 = vrot.slane %v1731, 4
        %v1754 = vrot.slane %v1732, 4
        %v1755 = vsel %vm558, %v1753, %v1754
        %v1756 = vrot.slane %v1733, 4
        %v1757 = vsel %vm558, %v1754, %v1756
        %v1764 = vadd.f32 %v1719, %v1745
        %v1765 = vadd.f32 %v1720, %v1747
        %v1766 = vadd.f32 %v1721, %v1750
        %v1767 = vadd.f32 %v1722, %v1752
        %v1768 = vadd.f32 %v1723, %v1755
        %v1769 = vadd.f32 %v1724, %v1757
        %v1770 = vrot.slane %v1680, 6
        %v1771 = vrot.slane %v1681, 6
        %v1772 = vsel %vm395, %v1770, %v1771
        %v1773 = vrot.slane %v1682, 6
        %v1774 = vsel %vm395, %v1771, %v1773
        %v1775 = vrot.slane %v1683, 6
        %v1776 = vrot.slane %v1684, 6
        %v1777 = vsel %vm395, %v1775, %v1776
        %v1778 = vrot.slane %v1685, 6
        %v1779 = vsel %vm395, %v1776, %v1778
        %v1780 = vrot.slane %v1686, 6
        %v1781 = vrot.slane %v1687, 6
        %v1782 = vsel %vm395, %v1780, %v1781
        %v1783 = vrot.slane %v1688, 6
        %v1784 = vsel %vm395, %v1781, %v1783
        %v1791 = vadd.f32 %v1764, %v1772
        %v1792 = vadd.f32 %v1765, %v1774
        %v1793 = vadd.f32 %v1766, %v1777
        %v1794 = vadd.f32 %v1767, %v1779
        %v1795 = vadd.f32 %v1768, %v1782
        %v1796 = vadd.f32 %v1769, %v1784
        %v1797 = vmul.f32 %v1671, 0.054488685
        %v1798 = vmul.f32 %v1672, 0.054488685
        %v1799 = vmul.f32 %v1673, 0.054488685
        %v1800 = vadd.f32 %v1791, %v1675
        %v1801 = vadd.f32 %v1792, %v1797
        %v1802 = vadd.f32 %v1793, %v1677
        %v1803 = vadd.f32 %v1794, %v1798
        %v1804 = vadd.f32 %v1795, %v1679
        %v1805 = vadd.f32 %v1796, %v1799
        %v1806 = vand.u32 %v215, 2
        %v1807 = vand.u32 %v216, 2
        %vm1808 = vcmp.eq.s32.totalorder %v1806, 0
        %vm1809 = vcmp.eq.s32.totalorder %v1807, 0
        %v1810 = vand.u32 %v218, 2
        %vm1811 = vcmp.eq.s32.totalorder %v1810, 0
        %1818 = vrot.lane.b32.xlu0 %v1476, 2
        %v1819 = vpop.permute.xlu0 %1818
        %1820 = vrot.lane.b32.xlu0 %v1477, 2
        %v1821 = vpop.permute.xlu0 %1820
        %1822 = vrot.lane.b32.xlu0 %v1478, 2
        %v1823 = vpop.permute.xlu0 %1822
        %1824 = vrot.lane.b32.xlu0 %v1479, 2
        %v1825 = vpop.permute.xlu0 %1824
        %1826 = vrot.lane.b32.xlu0 %v1480, 2
        %v1827 = vpop.permute.xlu0 %1826
        %1828 = vrot.lane.b32.xlu0 %v1481, 2
        %v1829 = vpop.permute.xlu0 %1828
        %v1836 = vsel %vm243, %v1476, %v1819
        %v1837 = vsel %vm243, %v1477, %v1821
        %v1838 = vsel %vm243, %v1478, %v1823
        %v1839 = vsel %vm243, %v1479, %v1825
        %v1840 = vsel %vm243, %v1480, %v1827
        %v1841 = vsel %vm243, %v1481, %v1829
        %v1842 = vsel %vm1811, %v1476, %v1836
        %v1843 = vsel %vm1811, %v1477, %v1837
        %v1844 = vsel %vm1811, %v1478, %v1838
        %v1845 = vsel %vm1811, %v1479, %v1839
        %v1846 = vsel %vm1811, %v1480, %v1840
        %v1847 = vsel %vm1811, %v1481, %v1841
        %v1854 = vrot.slane %v1842, 6
        %v1855 = vrot.slane %v1843, 6
        %v1856 = vsel %vm395, %v1854, %v1855
        %v1857 = vrot.slane %v1844, 6
        %v1858 = vrot.slane %v1845, 6
        %v1859 = vsel %vm395, %v1857, %v1858
        %v1860 = vrot.slane %v1846, 6
        %v1861 = vrot.slane %v1847, 6
        %v1862 = vsel %vm395, %v1860, %v1861
        %v1869 = vsel %vm395, %v1842, %v1854
        %v1870 = vsel %vm395, %v1844, %v1857
        %v1871 = vsel %vm395, %v1846, %v1860
        %v1872 = vsel %vm1808, %v1842, %v1869
        %v1873 = vsel %vm1809, %v1843, %v1856
        %v1874 = vsel %vm1808, %v1844, %v1870
        %v1875 = vsel %vm1809, %v1845, %v1859
        %v1876 = vsel %vm1808, %v1846, %v1871
        %v1877 = vsel %vm1809, %v1847, %v1862
        %v1878 = vsub.f32 %v580, %v1872
        %v1879 = vsub.f32 %v581, %v1873
        %v1880 = vsub.f32 %v582, %v1874
        %v1881 = vsub.f32 %v583, %v1875
        %v1882 = vsub.f32 %v584, %v1876
        %v1883 = vsub.f32 %v585, %v1877
        %v1884 = vand.u32 2147483647, %v1878
        %v1885 = vand.u32 2147483647, %v1879
        %v1886 = vand.u32 2147483647, %v1880
        %v1887 = vand.u32 2147483647, %v1881
        %v1888 = vand.u32 2147483647, %v1882
        %v1889 = vand.u32 2147483647, %v1883
        %v1890 = vsel %vm1032, %v1884, 0.0
        %v1891 = vsel %vm1032, %v1886, 0.0
        %v1892 = vadd.f32 %v1890, %v1891
        %v1893 = vsel %vm1032, %v1888, 0.0
        %v1894 = vadd.f32 %v1892, %v1893
        %v1895 = vsel %vm1032, %v1885, 0.0
        %v1896 = vsel %vm1032, %v1887, 0.0
        %v1897 = vadd.f32 %v1895, %v1896
        %v1898 = vsel %vm1032, %v1889, 0.0
        %v1899 = vadd.f32 %v1897, %v1898
        %v1900 = vmul.f32 %v1894, %v1043
        %v1901 = vmul.f32 %v1899, %v1043
        %1908 = vrot.lane.b32.xlu0 %v1800, 2
        %v1909 = vpop.permute.xlu0 %1908
        %1910 = vrot.lane.b32.xlu0 %v1801, 2
        %v1911 = vpop.permute.xlu0 %1910
        %1912 = vrot.lane.b32.xlu0 %v1802, 2
        %v1913 = vpop.permute.xlu0 %1912
        %1914 = vrot.lane.b32.xlu0 %v1803, 2
        %v1915 = vpop.permute.xlu0 %1914
        %1916 = vrot.lane.b32.xlu0 %v1804, 2
        %v1917 = vpop.permute.xlu0 %1916
        %1918 = vrot.lane.b32.xlu0 %v1805, 2
        %v1919 = vpop.permute.xlu0 %1918
        %v1926 = vsel %vm243, %v1800, %v1909
        %v1927 = vsel %vm243, %v1801, %v1911
        %v1928 = vsel %vm243, %v1802, %v1913
        %v1929 = vsel %vm243, %v1803, %v1915
        %v1930 = vsel %vm243, %v1804, %v1917
        %v1931 = vsel %vm243, %v1805, %v1919
        %v1932 = vsel %vm1811, %v1800, %v1926
        %v1933 = vsel %vm1811, %v1801, %v1927
        %v1934 = vsel %vm1811, %v1802, %v1928
        %v1935 = vsel %vm1811, %v1803, %v1929
        %v1936 = vsel %vm1811, %v1804, %v1930
        %v1937 = vsel %vm1811, %v1805, %v1931
        %v1944 = vrot.slane %v1932, 6
        %v1945 = vrot.slane %v1933, 6
        %v1946 = vsel %vm395, %v1944, %v1945
        %v1947 = vrot.slane %v1934, 6
        %v1948 = vrot.slane %v1935, 6
        %v1949 = vsel %vm395, %v1947, %v1948
        %v1950 = vrot.slane %v1936, 6
        %v1951 = vrot.slane %v1937, 6
        %v1952 = vsel %vm395, %v1950, %v1951
        %v1959 = vsel %vm395, %v1932, %v1944
        %v1960 = vsel %vm395, %v1934, %v1947
        %v1961 = vsel %vm395, %v1936, %v1950
        %v1962 = vsel %vm1808, %v1932, %v1959
        %v1963 = vsel %vm1809, %v1933, %v1946
        %v1964 = vsel %vm1808, %v1934, %v1960
        %v1965 = vsel %vm1809, %v1935, %v1949
        %v1966 = vsel %vm1808, %v1936, %v1961
        %v1967 = vsel %vm1809, %v1937, %v1952
        %v1968 = vsub.f32 %v940, %v1962
        %v1969 = vsub.f32 %v941, %v1963
        %v1970 = vsub.f32 %v942, %v1964
        %v1971 = vsub.f32 %v943, %v1965
        %v1972 = vsub.f32 %v944, %v1966
        %v1973 = vsub.f32 %v945, %v1967
        %v1974 = vand.u32 2147483647, %v1968
        %v1975 = vand.u32 2147483647, %v1969
        %v1976 = vand.u32 2147483647, %v1970
        %v1977 = vand.u32 2147483647, %v1971
        %v1978 = vand.u32 2147483647, %v1972
        %v1979 = vand.u32 2147483647, %v1973
        %v1980 = vsel %vm1032, %v1974, 0.0
        %v1981 = vsel %vm1032, %v1976, 0.0
        %v1982 = vadd.f32 %v1980, %v1981
        %v1983 = vsel %vm1032, %v1978, 0.0
        %v1984 = vadd.f32 %v1982, %v1983
        %v1985 = vsel %vm1032, %v1975, 0.0
        %v1986 = vsel %vm1032, %v1977, 0.0
        %v1987 = vadd.f32 %v1985, %v1986
        %v1988 = vsel %vm1032, %v1979, 0.0
        %v1989 = vadd.f32 %v1987, %v1988
        %v1990 = vmul.f32 %v1984, %v1043
        %v1991 = vmul.f32 %v1989, %v1043
        %v1992 = vsub.f32 %v1900, %v1990
        %v1993 = vsub.f32 %v1901, %v1991
        %v1994 = vand.u32 2147483647, %v1992
        %v1995 = vand.u32 2147483647, %v1993
        %vm1996 = vmand %vm948, %vm951
        %vm1997 = vmand %vm949, %vm951
        %v1998 = vsel %vm1996, %v1994, 0.0
        %v1999 = vsel %vm1997, %v1995, 0.0
        %v2000 = vsel %vm1032, %v1998, 0.0
        %v2001 = vsel %vm1032, %v1999, 0.0
        %v2002 = vadd.f32 %v2000, %v2001
        %2003 = vadd.xlane.f32.xlu0 %v2002
        %v2004 = vpop.xlane.xlu0 %2003
        %v2005 = vrot.slane %v2004, 4
        %v2006 = vadd.f32 %v2004, %v2005
        %v2007 = vrot.slane %v2006, 2
        %v2008 = vadd.f32 %v2006, %v2007
        %v2009 = vrot.slane %v2008, 1
        %v2010 = vadd.f32 %v2008, %v2009
        %s2011 = vtos %v2010
        %v2012 = vrcp.pop 64.0
        %s2013 = vtos %v2012
        %s2014 = smul.f32 %s2011, %s2013
        %s2015 = sadd.f32 %s1155, %s2014
        %2016 = vrot.lane.b32.xlu0 %v1476, 8
        %v2017 = vpop.permute.xlu0 %2016
        %2018 = vrot.lane.b32.xlu0 %v1477, 8
        %v2019 = vpop.permute.xlu0 %2018
        %2020 = vrot.lane.b32.xlu0 %v1478, 8
        %v2021 = vpop.permute.xlu0 %2020
        %2022 = vrot.lane.b32.xlu0 %v1479, 8
        %v2023 = vpop.permute.xlu0 %2022
        %2024 = vrot.lane.b32.xlu0 %v1480, 8
        %v2025 = vpop.permute.xlu0 %2024
        %2026 = vrot.lane.b32.xlu0 %v1481, 8
        %v2027 = vpop.permute.xlu0 %2026
        %vm2034 = vcmask 64512
        %v2035 = vsel %vm2034, 0.0, %v2017
        %v2036 = vsel %vm2034, 0.0, %v2019
        %v2037 = vsel %vm2034, 0.0, %v2021
        %v2038 = vsel %vm2034, 0.0, %v2023
        %v2039 = vsel %vm2034, 0.0, %v2025
        %v2040 = vsel %vm2034, 0.0, %v2027
        %vm2041 = vcmask 195584
        %v2042 = vsel %vm2041, %v2035, 0.0
        %v2043 = vsel %vm2041, %v2036, 0.0
        %v2044 = vsel %vm2041, %v2037, 0.0
        %v2045 = vsel %vm2041, %v2038, 0.0
        %v2046 = vsel %vm2041, %v2039, 0.0
        %v2047 = vsel %vm2041, %v2040, 0.0
        %v2048 = vmul.f32 %v2042, 0.054488685
        %v2049 = vmul.f32 %v2043, 0.054488685
        %v2050 = vmul.f32 %v2044, 0.054488685
        %v2051 = vmul.f32 %v2045, 0.054488685
        %v2052 = vmul.f32 %v2046, 0.054488685
        %v2053 = vmul.f32 %v2047, 0.054488685
        %v2054 = vmul.f32 %v2042, 0.24420135
        %v2055 = vmul.f32 %v2043, 0.24420135
        %v2056 = vmul.f32 %v2044, 0.24420135
        %v2057 = vmul.f32 %v2045, 0.24420135
        %v2058 = vmul.f32 %v2046, 0.24420135
        %v2059 = vmul.f32 %v2047, 0.24420135
        %2066 = vrot.lane.b32.xlu0 %v2054, 124
        %v2067 = vpop.permute.xlu0 %2066
        %2068 = vrot.lane.b32.xlu0 %v2055, 124
        %v2069 = vpop.permute.xlu0 %2068
        %2070 = vrot.lane.b32.xlu0 %v2056, 124
        %v2071 = vpop.permute.xlu0 %2070
        %2072 = vrot.lane.b32.xlu0 %v2057, 124
        %v2073 = vpop.permute.xlu0 %2072
        %2074 = vrot.lane.b32.xlu0 %v2058, 124
        %v2075 = vpop.permute.xlu0 %2074
        %2076 = vrot.lane.b32.xlu0 %v2059, 124
        %v2077 = vpop.permute.xlu0 %2076
        %v2084 = vadd.f32 %v2048, %v2067
        %v2085 = vadd.f32 %v2049, %v2069
        %v2086 = vadd.f32 %v2050, %v2071
        %v2087 = vadd.f32 %v2051, %v2073
        %v2088 = vadd.f32 %v2052, %v2075
        %v2089 = vadd.f32 %v2053, %v2077
        %v2090 = vmul.f32 %v2042, 0.40261996
        %v2091 = vmul.f32 %v2043, 0.40261996
        %v2092 = vmul.f32 %v2044, 0.40261996
        %v2093 = vmul.f32 %v2045, 0.40261996
        %v2094 = vmul.f32 %v2046, 0.40261996
        %v2095 = vmul.f32 %v2047, 0.40261996
        %2102 = vrot.lane.b32.xlu0 %v2090, 120
        %v2103 = vpop.permute.xlu0 %2102
        %2104 = vrot.lane.b32.xlu0 %v2091, 120
        %v2105 = vpop.permute.xlu0 %2104
        %2106 = vrot.lane.b32.xlu0 %v2092, 120
        %v2107 = vpop.permute.xlu0 %2106
        %2108 = vrot.lane.b32.xlu0 %v2093, 120
        %v2109 = vpop.permute.xlu0 %2108
        %2110 = vrot.lane.b32.xlu0 %v2094, 120
        %v2111 = vpop.permute.xlu0 %2110
        %2112 = vrot.lane.b32.xlu0 %v2095, 120
        %v2113 = vpop.permute.xlu0 %2112
        %v2120 = vadd.f32 %v2084, %v2103
        %v2121 = vadd.f32 %v2085, %v2105
        %v2122 = vadd.f32 %v2086, %v2107
        %v2123 = vadd.f32 %v2087, %v2109
        %v2124 = vadd.f32 %v2088, %v2111
        %v2125 = vadd.f32 %v2089, %v2113
        %2126 = vrot.lane.b32.xlu0 %v2054, 116
        %v2127 = vpop.permute.xlu0 %2126
        %2128 = vrot.lane.b32.xlu0 %v2055, 116
        %v2129 = vpop.permute.xlu0 %2128
        %2130 = vrot.lane.b32.xlu0 %v2056, 116
        %v2131 = vpop.permute.xlu0 %2130
        %2132 = vrot.lane.b32.xlu0 %v2057, 116
        %v2133 = vpop.permute.xlu0 %2132
        %2134 = vrot.lane.b32.xlu0 %v2058, 116
        %v2135 = vpop.permute.xlu0 %2134
        %2136 = vrot.lane.b32.xlu0 %v2059, 116
        %v2137 = vpop.permute.xlu0 %2136
        %v2144 = vadd.f32 %v2120, %v2127
        %v2145 = vadd.f32 %v2121, %v2129
        %v2146 = vadd.f32 %v2122, %v2131
        %v2147 = vadd.f32 %v2123, %v2133
        %v2148 = vadd.f32 %v2124, %v2135
        %v2149 = vadd.f32 %v2125, %v2137
        %2156 = vrot.lane.b32.xlu0 %v2048, 112
        %v2157 = vpop.permute.xlu0 %2156
        %2158 = vrot.lane.b32.xlu0 %v2049, 112
        %v2159 = vpop.permute.xlu0 %2158
        %2160 = vrot.lane.b32.xlu0 %v2050, 112
        %v2161 = vpop.permute.xlu0 %2160
        %2162 = vrot.lane.b32.xlu0 %v2051, 112
        %v2163 = vpop.permute.xlu0 %2162
        %2164 = vrot.lane.b32.xlu0 %v2052, 112
        %v2165 = vpop.permute.xlu0 %2164
        %2166 = vrot.lane.b32.xlu0 %v2053, 112
        %v2167 = vpop.permute.xlu0 %2166
        %v2174 = vadd.f32 %v2144, %v2157
        %v2175 = vadd.f32 %v2145, %v2159
        %v2176 = vadd.f32 %v2146, %v2161
        %v2177 = vadd.f32 %v2147, %v2163
        %v2178 = vadd.f32 %v2148, %v2165
        %v2179 = vadd.f32 %v2149, %v2167
        %v2180 = vmul.f32 %v2174, 0.054488685
        %v2181 = vmul.f32 %v2176, 0.054488685
        %v2182 = vmul.f32 %v2178, 0.054488685
        %v2183 = vmul.f32 %v2174, 0.24420135
        %v2184 = vmul.f32 %v2175, 0.24420135
        %v2185 = vmul.f32 %v2176, 0.24420135
        %v2186 = vmul.f32 %v2177, 0.24420135
        %v2187 = vmul.f32 %v2178, 0.24420135
        %v2188 = vmul.f32 %v2179, 0.24420135
        %v2196 = vrot.slane 0.0, 4
        %v2197 = vrot.slane %v2183, 4
        %v2198 = vsel %vm558, %v2196, %v2197
        %v2199 = vrot.slane %v2184, 4
        %v2200 = vsel %vm558, %v2197, %v2199
        %v2201 = vrot.slane %v2185, 4
        %v2202 = vsel %vm558, %v2196, %v2201
        %v2203 = vrot.slane %v2186, 4
        %v2204 = vsel %vm558, %v2201, %v2203
        %v2205 = vrot.slane %v2187, 4
        %v2206 = vsel %vm558, %v2196, %v2205
        %v2207 = vrot.slane %v2188, 4
        %v2208 = vsel %vm558, %v2205, %v2207
        %v2215 = vadd.f32 %v2198, 0.0
        %v2216 = vadd.f32 %v2180, %v2200
        %v2217 = vadd.f32 %v2202, 0.0
        %v2218 = vadd.f32 %v2181, %v2204
        %v2219 = vadd.f32 %v2206, 0.0
        %v2220 = vadd.f32 %v2182, %v2208
        %v2221 = vmul.f32 %v2174, 0.40261996
        %v2222 = vmul.f32 %v2175, 0.40261996
        %v2223 = vmul.f32 %v2176, 0.40261996
        %v2224 = vmul.f32 %v2177, 0.40261996
        %v2225 = vmul.f32 %v2178, 0.40261996
        %v2226 = vmul.f32 %v2179, 0.40261996
        %v2227 = vadd.f32 %v2215, %v2221
        %v2228 = vadd.f32 %v2216, %v2222
        %v2229 = vadd.f32 %v2217, %v2223
        %v2230 = vadd.f32 %v2218, %v2224
        %v2231 = vadd.f32 %v2219, %v2225
        %v2232 = vadd.f32 %v2220, %v2226
        %v2233 = vsel %vm558, %v2199, %v2196
        %v2234 = vsel %vm558, %v2203, %v2196
        %v2235 = vsel %vm558, %v2207, %v2196
        %v2239 = vadd.f32 %v2227, %v2200
        %v2240 = vadd.f32 %v2228, %v2233
        %v2241 = vadd.f32 %v2229, %v2204
        %v2242 = vadd.f32 %v2230, %v2234
        %v2243 = vadd.f32 %v2231, %v2208
        %v2244 = vadd.f32 %v2232, %v2235
        %v2245 = vmul.f32 %v2175, 0.054488685
        %v2246 = vmul.f32 %v2177, 0.054488685
        %v2247 = vmul.f32 %v2179, 0.054488685
        %v2248 = vadd.f32 %v2239, %v2245
        %v2249 = vadd.f32 %v2240, 0.0
        %v2250 = vadd.f32 %v2241, %v2246
        %v2251 = vadd.f32 %v2242, 0.0
        %v2252 = vadd.f32 %v2243, %v2247
        %v2253 = vadd.f32 %v2244, 0.0
        %2254 = vrot.lane.b32.xlu0 %v1800, 8
        %v2255 = vpop.permute.xlu0 %2254
        %2256 = vrot.lane.b32.xlu0 %v1801, 8
        %v2257 = vpop.permute.xlu0 %2256
        %2258 = vrot.lane.b32.xlu0 %v1802, 8
        %v2259 = vpop.permute.xlu0 %2258
        %2260 = vrot.lane.b32.xlu0 %v1803, 8
        %v2261 = vpop.permute.xlu0 %2260
        %2262 = vrot.lane.b32.xlu0 %v1804, 8
        %v2263 = vpop.permute.xlu0 %2262
        %2264 = vrot.lane.b32.xlu0 %v1805, 8
        %v2265 = vpop.permute.xlu0 %2264
        %v2272 = vsel %vm2034, 0.0, %v2255
        %v2273 = vsel %vm2034, 0.0, %v2257
        %v2274 = vsel %vm2034, 0.0, %v2259
        %v2275 = vsel %vm2034, 0.0, %v2261
        %v2276 = vsel %vm2034, 0.0, %v2263
        %v2277 = vsel %vm2034, 0.0, %v2265
        %v2278 = vsel %vm2041, %v2272, 0.0
        %v2279 = vsel %vm2041, %v2273, 0.0
        %v2280 = vsel %vm2041, %v2274, 0.0
        %v2281 = vsel %vm2041, %v2275, 0.0
        %v2282 = vsel %vm2041, %v2276, 0.0
        %v2283 = vsel %vm2041, %v2277, 0.0
        %v2284 = vmul.f32 %v2278, 0.054488685
        %v2285 = vmul.f32 %v2279, 0.054488685
        %v2286 = vmul.f32 %v2280, 0.054488685
        %v2287 = vmul.f32 %v2281, 0.054488685
        %v2288 = vmul.f32 %v2282, 0.054488685
        %v2289 = vmul.f32 %v2283, 0.054488685
        %v2290 = vmul.f32 %v2278, 0.24420135
        %v2291 = vmul.f32 %v2279, 0.24420135
        %v2292 = vmul.f32 %v2280, 0.24420135
        %v2293 = vmul.f32 %v2281, 0.24420135
        %v2294 = vmul.f32 %v2282, 0.24420135
        %v2295 = vmul.f32 %v2283, 0.24420135
        %2302 = vrot.lane.b32.xlu0 %v2290, 124
        %v2303 = vpop.permute.xlu0 %2302
        %2304 = vrot.lane.b32.xlu0 %v2291, 124
        %v2305 = vpop.permute.xlu0 %2304
        %2306 = vrot.lane.b32.xlu0 %v2292, 124
        %v2307 = vpop.permute.xlu0 %2306
        %2308 = vrot.lane.b32.xlu0 %v2293, 124
        %v2309 = vpop.permute.xlu0 %2308
        %2310 = vrot.lane.b32.xlu0 %v2294, 124
        %v2311 = vpop.permute.xlu0 %2310
        %2312 = vrot.lane.b32.xlu0 %v2295, 124
        %v2313 = vpop.permute.xlu0 %2312
        %v2320 = vadd.f32 %v2284, %v2303
        %v2321 = vadd.f32 %v2285, %v2305
        %v2322 = vadd.f32 %v2286, %v2307
        %v2323 = vadd.f32 %v2287, %v2309
        %v2324 = vadd.f32 %v2288, %v2311
        %v2325 = vadd.f32 %v2289, %v2313
        %v2326 = vmul.f32 %v2278, 0.40261996
        %v2327 = vmul.f32 %v2279, 0.40261996
        %v2328 = vmul.f32 %v2280, 0.40261996
        %v2329 = vmul.f32 %v2281, 0.40261996
        %v2330 = vmul.f32 %v2282, 0.40261996
        %v2331 = vmul.f32 %v2283, 0.40261996
        %2338 = vrot.lane.b32.xlu0 %v2326, 120
        %v2339 = vpop.permute.xlu0 %2338
        %2340 = vrot.lane.b32.xlu0 %v2327, 120
        %v2341 = vpop.permute.xlu0 %2340
        %2342 = vrot.lane.b32.xlu0 %v2328, 120
        %v2343 = vpop.permute.xlu0 %2342
        %2344 = vrot.lane.b32.xlu0 %v2329, 120
        %v2345 = vpop.permute.xlu0 %2344
        %2346 = vrot.lane.b32.xlu0 %v2330, 120
        %v2347 = vpop.permute.xlu0 %2346
        %2348 = vrot.lane.b32.xlu0 %v2331, 120
        %v2349 = vpop.permute.xlu0 %2348
        %v2356 = vadd.f32 %v2320, %v2339
        %v2357 = vadd.f32 %v2321, %v2341
        %v2358 = vadd.f32 %v2322, %v2343
        %v2359 = vadd.f32 %v2323, %v2345
        %v2360 = vadd.f32 %v2324, %v2347
        %v2361 = vadd.f32 %v2325, %v2349
        %2362 = vrot.lane.b32.xlu0 %v2290, 116
        %v2363 = vpop.permute.xlu0 %2362
        %2364 = vrot.lane.b32.xlu0 %v2291, 116
        %v2365 = vpop.permute.xlu0 %2364
        %2366 = vrot.lane.b32.xlu0 %v2292, 116
        %v2367 = vpop.permute.xlu0 %2366
        %2368 = vrot.lane.b32.xlu0 %v2293, 116
        %v2369 = vpop.permute.xlu0 %2368
        %2370 = vrot.lane.b32.xlu0 %v2294, 116
        %v2371 = vpop.permute.xlu0 %2370
        %2372 = vrot.lane.b32.xlu0 %v2295, 116
        %v2373 = vpop.permute.xlu0 %2372
        %v2380 = vadd.f32 %v2356, %v2363
        %v2381 = vadd.f32 %v2357, %v2365
        %v2382 = vadd.f32 %v2358, %v2367
        %v2383 = vadd.f32 %v2359, %v2369
        %v2384 = vadd.f32 %v2360, %v2371
        %v2385 = vadd.f32 %v2361, %v2373
        %2392 = vrot.lane.b32.xlu0 %v2284, 112
        %v2393 = vpop.permute.xlu0 %2392
        %2394 = vrot.lane.b32.xlu0 %v2285, 112
        %v2395 = vpop.permute.xlu0 %2394
        %2396 = vrot.lane.b32.xlu0 %v2286, 112
        %v2397 = vpop.permute.xlu0 %2396
        %2398 = vrot.lane.b32.xlu0 %v2287, 112
        %v2399 = vpop.permute.xlu0 %2398
        %2400 = vrot.lane.b32.xlu0 %v2288, 112
        %v2401 = vpop.permute.xlu0 %2400
        %2402 = vrot.lane.b32.xlu0 %v2289, 112
        %v2403 = vpop.permute.xlu0 %2402
        %v2410 = vadd.f32 %v2380, %v2393
        %v2411 = vadd.f32 %v2381, %v2395
        %v2412 = vadd.f32 %v2382, %v2397
        %v2413 = vadd.f32 %v2383, %v2399
        %v2414 = vadd.f32 %v2384, %v2401
        %v2415 = vadd.f32 %v2385, %v2403
        %v2416 = vmul.f32 %v2410, 0.054488685
        %v2417 = vmul.f32 %v2412, 0.054488685
        %v2418 = vmul.f32 %v2414, 0.054488685
        %v2419 = vmul.f32 %v2410, 0.24420135
        %v2420 = vmul.f32 %v2411, 0.24420135
        %v2421 = vmul.f32 %v2412, 0.24420135
        %v2422 = vmul.f32 %v2413, 0.24420135
        %v2423 = vmul.f32 %v2414, 0.24420135
        %v2424 = vmul.f32 %v2415, 0.24420135
        %v2431 = vrot.slane %v2419, 4
        %v2432 = vsel %vm558, %v2196, %v2431
        %v2433 = vrot.slane %v2420, 4
        %v2434 = vsel %vm558, %v2431, %v2433
        %v2435 = vrot.slane %v2421, 4
        %v2436 = vsel %vm558, %v2196, %v2435
        %v2437 = vrot.slane %v2422, 4
        %v2438 = vsel %vm558, %v2435, %v2437
        %v2439 = vrot.slane %v2423, 4
        %v2440 = vsel %vm558, %v2196, %v2439
        %v2441 = vrot.slane %v2424, 4
        %v2442 = vsel %vm558, %v2439, %v2441
        %v2449 = vadd.f32 %v2432, 0.0
        %v2450 = vadd.f32 %v2416, %v2434
        %v2451 = vadd.f32 %v2436, 0.0
        %v2452 = vadd.f32 %v2417, %v2438
        %v2453 = vadd.f32 %v2440, 0.0
        %v2454 = vadd.f32 %v2418, %v2442
        %v2455 = vmul.f32 %v2410, 0.40261996
        %v2456 = vmul.f32 %v2411, 0.40261996
        %v2457 = vmul.f32 %v2412, 0.40261996
        %v2458 = vmul.f32 %v2413, 0.40261996
        %v2459 = vmul.f32 %v2414, 0.40261996
        %v2460 = vmul.f32 %v2415, 0.40261996
        %v2461 = vadd.f32 %v2449, %v2455
        %v2462 = vadd.f32 %v2450, %v2456
        %v2463 = vadd.f32 %v2451, %v2457
        %v2464 = vadd.f32 %v2452, %v2458
        %v2465 = vadd.f32 %v2453, %v2459
        %v2466 = vadd.f32 %v2454, %v2460
        %v2467 = vsel %vm558, %v2433, %v2196
        %v2468 = vsel %vm558, %v2437, %v2196
        %v2469 = vsel %vm558, %v2441, %v2196
        %v2473 = vadd.f32 %v2461, %v2434
        %v2474 = vadd.f32 %v2462, %v2467
        %v2475 = vadd.f32 %v2463, %v2438
        %v2476 = vadd.f32 %v2464, %v2468
        %v2477 = vadd.f32 %v2465, %v2442
        %v2478 = vadd.f32 %v2466, %v2469
        %v2479 = vmul.f32 %v2411, 0.054488685
        %v2480 = vmul.f32 %v2413, 0.054488685
        %v2481 = vmul.f32 %v2415, 0.054488685
        %v2482 = vadd.f32 %v2473, %v2479
        %v2483 = vadd.f32 %v2474, 0.0
        %v2484 = vadd.f32 %v2475, %v2480
        %v2485 = vadd.f32 %v2476, 0.0
        %v2486 = vadd.f32 %v2477, %v2481
        %v2487 = vadd.f32 %v2478, 0.0
        %v2488 = vand.u32 %v215, 4
        %v2489 = vand.u32 %v216, 4
        %vm2490 = vcmp.eq.s32.totalorder %v2488, 0
        %vm2491 = vcmp.eq.s32.totalorder %v2489, 0
        %v2492 = vand.u32 %v218, 4
        %vm2493 = vcmp.eq.s32.totalorder %v2492, 0
        %2500 = vrot.lane.b32.xlu0 %v2248, 4
        %v2501 = vpop.permute.xlu0 %2500
        %2502 = vrot.lane.b32.xlu0 %v2249, 4
        %v2503 = vpop.permute.xlu0 %2502
        %2504 = vrot.lane.b32.xlu0 %v2250, 4
        %v2505 = vpop.permute.xlu0 %2504
        %2506 = vrot.lane.b32.xlu0 %v2251, 4
        %v2507 = vpop.permute.xlu0 %2506
        %2508 = vrot.lane.b32.xlu0 %v2252, 4
        %v2509 = vpop.permute.xlu0 %2508
        %2510 = vrot.lane.b32.xlu0 %v2253, 4
        %v2511 = vpop.permute.xlu0 %2510
        %v2518 = vsel %vm1174, %v2248, %v2501
        %v2519 = vsel %vm1174, %v2249, %v2503
        %v2520 = vsel %vm1174, %v2250, %v2505
        %v2521 = vsel %vm1174, %v2251, %v2507
        %v2522 = vsel %vm1174, %v2252, %v2509
        %v2523 = vsel %vm1174, %v2253, %v2511
        %v2524 = vsel %vm2493, %v2248, %v2518
        %v2525 = vsel %vm2493, %v2249, %v2519
        %v2526 = vsel %vm2493, %v2250, %v2520
        %v2527 = vsel %vm2493, %v2251, %v2521
        %v2528 = vsel %vm2493, %v2252, %v2522
        %v2529 = vsel %vm2493, %v2253, %v2523
        %v2536 = vrot.slane %v2524, 4
        %v2537 = vrot.slane %v2525, 4
        %v2538 = vsel %vm558, %v2536, %v2537
        %v2539 = vrot.slane %v2526, 4
        %v2540 = vrot.slane %v2527, 4
        %v2541 = vsel %vm558, %v2539, %v2540
        %v2542 = vrot.slane %v2528, 4
        %v2543 = vrot.slane %v2529, 4
        %v2544 = vsel %vm558, %v2542, %v2543
        %v2551 = vsel %vm558, %v2524, %v2536
        %v2552 = vsel %vm558, %v2526, %v2539
        %v2553 = vsel %vm558, %v2528, %v2542
        %v2554 = vsel %vm2490, %v2524, %v2551
        %v2555 = vsel %vm2491, %v2525, %v2538
        %v2556 = vsel %vm2490, %v2526, %v2552
        %v2557 = vsel %vm2491, %v2527, %v2541
        %v2558 = vsel %vm2490, %v2528, %v2553
        %v2559 = vsel %vm2491, %v2529, %v2544
        %v2560 = vsub.f32 %v1476, %v2554
        %v2561 = vsub.f32 %v1477, %v2555
        %v2562 = vsub.f32 %v1478, %v2556
        %v2563 = vsub.f32 %v1479, %v2557
        %v2564 = vsub.f32 %v1480, %v2558
        %v2565 = vsub.f32 %v1481, %v2559
        %v2566 = vand.u32 2147483647, %v2560
        %v2567 = vand.u32 2147483647, %v2561
        %v2568 = vand.u32 2147483647, %v2562
        %v2569 = vand.u32 2147483647, %v2563
        %v2570 = vand.u32 2147483647, %v2564
        %v2571 = vand.u32 2147483647, %v2565
        %v2572 = vsel %vm1032, %v2566, 0.0
        %v2573 = vsel %vm1032, %v2568, 0.0
        %v2574 = vadd.f32 %v2572, %v2573
        %v2575 = vsel %vm1032, %v2570, 0.0
        %v2576 = vadd.f32 %v2574, %v2575
        %v2577 = vsel %vm1032, %v2567, 0.0
        %v2578 = vsel %vm1032, %v2569, 0.0
        %v2579 = vadd.f32 %v2577, %v2578
        %v2580 = vsel %vm1032, %v2571, 0.0
        %v2581 = vadd.f32 %v2579, %v2580
        %v2582 = vmul.f32 %v2576, %v1043
        %v2583 = vmul.f32 %v2581, %v1043
        %2590 = vrot.lane.b32.xlu0 %v2482, 4
        %v2591 = vpop.permute.xlu0 %2590
        %2592 = vrot.lane.b32.xlu0 %v2483, 4
        %v2593 = vpop.permute.xlu0 %2592
        %2594 = vrot.lane.b32.xlu0 %v2484, 4
        %v2595 = vpop.permute.xlu0 %2594
        %2596 = vrot.lane.b32.xlu0 %v2485, 4
        %v2597 = vpop.permute.xlu0 %2596
        %2598 = vrot.lane.b32.xlu0 %v2486, 4
        %v2599 = vpop.permute.xlu0 %2598
        %2600 = vrot.lane.b32.xlu0 %v2487, 4
        %v2601 = vpop.permute.xlu0 %2600
        %v2608 = vsel %vm1174, %v2482, %v2591
        %v2609 = vsel %vm1174, %v2483, %v2593
        %v2610 = vsel %vm1174, %v2484, %v2595
        %v2611 = vsel %vm1174, %v2485, %v2597
        %v2612 = vsel %vm1174, %v2486, %v2599
        %v2613 = vsel %vm1174, %v2487, %v2601
        %v2614 = vsel %vm2493, %v2482, %v2608
        %v2615 = vsel %vm2493, %v2483, %v2609
        %v2616 = vsel %vm2493, %v2484, %v2610
        %v2617 = vsel %vm2493, %v2485, %v2611
        %v2618 = vsel %vm2493, %v2486, %v2612
        %v2619 = vsel %vm2493, %v2487, %v2613
        %v2626 = vrot.slane %v2614, 4
        %v2627 = vrot.slane %v2615, 4
        %v2628 = vsel %vm558, %v2626, %v2627
        %v2629 = vrot.slane %v2616, 4
        %v2630 = vrot.slane %v2617, 4
        %v2631 = vsel %vm558, %v2629, %v2630
        %v2632 = vrot.slane %v2618, 4
        %v2633 = vrot.slane %v2619, 4
        %v2634 = vsel %vm558, %v2632, %v2633
        %v2641 = vsel %vm558, %v2614, %v2626
        %v2642 = vsel %vm558, %v2616, %v2629
        %v2643 = vsel %vm558, %v2618, %v2632
        %v2644 = vsel %vm2490, %v2614, %v2641
        %v2645 = vsel %vm2491, %v2615, %v2628
        %v2646 = vsel %vm2490, %v2616, %v2642
        %v2647 = vsel %vm2491, %v2617, %v2631
        %v2648 = vsel %vm2490, %v2618, %v2643
        %v2649 = vsel %vm2491, %v2619, %v2634
        %v2650 = vsub.f32 %v1800, %v2644
        %v2651 = vsub.f32 %v1801, %v2645
        %v2652 = vsub.f32 %v1802, %v2646
        %v2653 = vsub.f32 %v1803, %v2647
        %v2654 = vsub.f32 %v1804, %v2648
        %v2655 = vsub.f32 %v1805, %v2649
        %v2656 = vand.u32 2147483647, %v2650
        %v2657 = vand.u32 2147483647, %v2651
        %v2658 = vand.u32 2147483647, %v2652
        %v2659 = vand.u32 2147483647, %v2653
        %v2660 = vand.u32 2147483647, %v2654
        %v2661 = vand.u32 2147483647, %v2655
        %v2662 = vsel %vm1032, %v2656, 0.0
        %v2663 = vsel %vm1032, %v2658, 0.0
        %v2664 = vadd.f32 %v2662, %v2663
        %v2665 = vsel %vm1032, %v2660, 0.0
        %v2666 = vadd.f32 %v2664, %v2665
        %v2667 = vsel %vm1032, %v2657, 0.0
        %v2668 = vsel %vm1032, %v2659, 0.0
        %v2669 = vadd.f32 %v2667, %v2668
        %v2670 = vsel %vm1032, %v2661, 0.0
        %v2671 = vadd.f32 %v2669, %v2670
        %v2672 = vmul.f32 %v2666, %v1043
        %v2673 = vmul.f32 %v2671, %v1043
        %v2674 = vsub.f32 %v2582, %v2672
        %v2675 = vsub.f32 %v2583, %v2673
        %v2676 = vand.u32 2147483647, %v2674
        %v2677 = vand.u32 2147483647, %v2675
        %v2678 = vand.u32 %v215, 3
        %v2679 = vand.u32 %v216, 3
        %vm2680 = vcmp.eq.s32.totalorder %v2678, 0
        %vm2681 = vcmp.eq.s32.totalorder %v2679, 0
        %v2682 = vand.u32 %v218, 3
        %vm2683 = vcmp.eq.s32.totalorder %v2682, 0
        %vm2684 = vmand %vm2680, %vm2683
        %vm2685 = vmand %vm2681, %vm2683
        %v2686 = vsel %vm2684, %v2676, 0.0
        %v2687 = vsel %vm2685, %v2677, 0.0
        %v2688 = vsel %vm1032, %v2686, 0.0
        %v2689 = vsel %vm1032, %v2687, 0.0
        %v2690 = vadd.f32 %v2688, %v2689
        %2691 = vadd.xlane.f32.xlu0 %v2690
        %v2692 = vpop.xlane.xlu0 %2691
        %v2693 = vrot.slane %v2692, 4
        %v2694 = vadd.f32 %v2692, %v2693
        %v2695 = vrot.slane %v2694, 2
        %v2696 = vadd.f32 %v2694, %v2695
        %v2697 = vrot.slane %v2696, 1
        %v2698 = vadd.f32 %v2696, %v2697
        %s2699 = vtos %v2698
        %v2700 = vrcp.pop 16.0
        %s2701 = vtos %v2700
        %s2702 = smul.f32 %s2699, %s2701
        %s2703 = sadd.f32 %s2015, %s2702
        %v2704 = vand.u32 %v215, 7
        %v2705 = vand.u32 %v216, 7
        %vm2706 = vcmp.eq.s32.totalorder %v2704, 0
        %vm2707 = vcmp.eq.s32.totalorder %v2705, 0
        %v2708 = vand.u32 %v218, 7
        %vm2709 = vcmp.eq.s32.totalorder %v2708, 0
        %vm2710 = vmand %vm2706, %vm2709
        %vm2711 = vmand %vm2707, %vm2709
        %v2712 = vsub.f32 %v2248, %v2482
        %v2713 = vsub.f32 %v2249, %v2483
        %v2714 = vsub.f32 %v2250, %v2484
        %v2715 = vsub.f32 %v2251, %v2485
        %v2716 = vsub.f32 %v2252, %v2486
        %v2717 = vsub.f32 %v2253, %v2487
        %v2718 = vand.u32 2147483647, %v2712
        %v2719 = vand.u32 2147483647, %v2713
        %v2720 = vand.u32 2147483647, %v2714
        %v2721 = vand.u32 2147483647, %v2715
        %v2722 = vand.u32 2147483647, %v2716
        %v2723 = vand.u32 2147483647, %v2717
        %v2724 = vsel %vm2710, %v2718, 0.0
        %v2725 = vsel %vm2711, %v2719, 0.0
        %v2726 = vsel %vm2710, %v2720, 0.0
        %v2727 = vsel %vm2711, %v2721, 0.0
        %v2728 = vsel %vm2710, %v2722, 0.0
        %v2729 = vsel %vm2711, %v2723, 0.0
        %v2730 = vsel %vm1032, %v2724, 0.0
        %v2731 = vsel %vm1032, %v2725, 0.0
        %v2732 = vadd.f32 %v2730, %v2731
        %v2733 = vsel %vm1032, %v2726, 0.0
        %v2734 = vadd.f32 %v2732, %v2733
        %v2735 = vsel %vm1032, %v2727, 0.0
        %v2736 = vadd.f32 %v2734, %v2735
        %v2737 = vsel %vm1032, %v2728, 0.0
        %v2738 = vadd.f32 %v2736, %v2737
        %v2739 = vsel %vm1032, %v2729, 0.0
        %v2740 = vadd.f32 %v2738, %v2739
        %2741 = vadd.xlane.f32.xlu0 %v2740
        %v2742 = vpop.xlane.xlu0 %2741
        %v2743 = vrot.slane %v2742, 4
        %v2744 = vadd.f32 %v2742, %v2743
        %v2745 = vrot.slane %v2744, 2
        %v2746 = vadd.f32 %v2744, %v2745
        %v2747 = vrot.slane %v2746, 1
        %v2748 = vadd.f32 %v2746, %v2747
        %s2749 = vtos %v2748
        %v2750 = vrcp.pop 12.0
        %s2751 = vtos %v2750
        %s2752 = smul.f32 %s2749, %s2751
        %s2753 = sadd.f32 %s2703, %s2752
        %v2754 = vstv %s2753
        %2755 = vst [vmem:[%s201] sm:$0xff] %v2754
        %p2756 = scmp.lt.s32.totalorder %s19, 1
        %s2757 = scalar_select %p2756, %s19, 1
        %s2758 = smul.addr %s2757, 8
        %s2759 = scalar_lea.vmem %s2, %s2758
        // Predicated region
        $region37: #{laplacian_pyramid_loss.1} parent=27 // pred_check
          %p2760 = pneg %p89
        $region38: #{laplacian_pyramid_loss.1} parent=27 // pred_check_branch
          %2762 = sbr.rel (%p2760) target = $region40
        $region39: #{laplacian_pyramid_loss.1} parent=27 // pred_region
          _
        $region40: #{laplacian_pyramid_loss.1} parent=27 // pred_fallthru
          _
      $region28: #{laplacian_pyramid_loss.1} parent=5 // pred_fallthru
        _
      %p2763 = scmp.le.s32.totalorder 2, %s14
      // Predicated region
      $region41: #{laplacian_pyramid_loss.1} parent=5 // pred_check
        %p2764 = pneg %p2763
      $region42: #{laplacian_pyramid_loss.1} parent=5 // pred_check_branch
        %2766 = sbr.rel (%p2764) target = $region44
      $region43: #{laplacian_pyramid_loss.1} parent=5 // pred_region
        %s2767 = ssub.s32 %s14, 2
        // Predicated region
        $region45: #{laplacian_pyramid_loss.1} parent=43 // pred_check
          %p2768 = pneg %p95
        $region46: #{laplacian_pyramid_loss.1} parent=43 // pred_check_branch
          %2770 = sbr.rel (%p2768) target = $region48
        $region47: #{laplacian_pyramid_loss.1} parent=43 // pred_region
          %p2771 = scmp.lt.s32.totalorder %s20, 1
          %s2772 = scalar_select %p2771, %s20, 1
          %s2773 = smul.addr %s2772, 8
          %s2774 = scalar_lea.vmem %s2, %s2773
        $region48: #{laplacian_pyramid_loss.1} parent=43 // pred_fallthru
          _
      $region44: #{laplacian_pyramid_loss.1} parent=5 // pred_fallthru
        _
    $region6: #{laplacian_pyramid_loss.1} parent=1 // loop_footer
      %s18 = sadd.s32 1, %s14
    $region7: #{laplacian_pyramid_loss.1} parent=1 // loop_footer_branch
      %13 = sbr.rel target = $region3
    $region8: #{laplacian_pyramid_loss.1} parent=1 // loop_exit
      _
    %2775 = vsyncpa [#allocation3], 1
    %s2776 = scalar_lea.sflag [#allocation3], 1
    %2777 = vsyncpa %s2776, 1
    %2778 = vsyncpa [#allocation5], 1
    %s2779 = scalar_lea.sflag [#allocation5], 1
    %2780 = vsyncpa %s2779, 1

</llo_original>
